<compile_context>
chip_gen: v6e
topology: v6e:2x2x1
jax: 0.10.0
libtpu: 0.0.40
codegen_flags: <defaults>
</compile_context>

<pallas_src>
import functools

import jax
import jax.numpy as jnp
from jax import lax
from jax.experimental import pallas as pl
from jax.experimental.pallas import tpu as pltpu


# ----------------------------- activation -----------------------------------
def _apply_act(h, act):
    # h is float32 inside the kernel.
    if act == "quick_gelu":            # Qwen2-VL vision default
        return h * jax.nn.sigmoid(1.702 * h)
    if act in ("gelu_new", "gelu_pytorch_tanh", "gelu_tanh"):
        return jax.nn.gelu(h, approximate=True)
    if act == "gelu":
        return jax.nn.gelu(h, approximate=False)
    if act == "silu":
        return h * jax.nn.sigmoid(h)
    if act == "relu":
        return jnp.maximum(h, 0.0)
    raise ValueError(f"unsupported hidden_act: {act}")


# ------------------------------- kernel --------------------------------------
def _vision_mlp_kernel(x_ref, w1_ref, b1_ref, w2_ref, b2_ref, o_ref, *scratch,
                       act, hidden_chunk, num_chunks):
    # x_ref : (row_tile, dim)                [compute dtype]
    # w1_ref: (dim, hidden_dim)              [compute dtype]
    # b1_ref: (1, hidden_dim)                [f32]
    # w2_ref: (hidden_dim, dim)              [compute dtype]
    # b2_ref: (1, dim)                       [f32]
    # scratch: () or ((row_tile, dim) f32 accumulator,)
    if num_chunks == 1:
        # Simple fused path: fc1 -> act -> fc2, all intermediates stay in VMEM.
        h = jnp.dot(x_ref[...], w1_ref[...], preferred_element_type=jnp.float32)
        h = h + b1_ref[...]
        a = _apply_act(h, act).astype(w2_ref.dtype)
        out = jnp.dot(a, w2_ref[...], preferred_element_type=jnp.float32)
        o_ref[...] = (out + b2_ref[...]).astype(o_ref.dtype)
        return

    # Hidden-chunked path: never materialize the full (rt, hidden) f32 intermediate.
    acc_ref, = scratch
    acc_ref[...] = jnp.zeros_like(acc_ref)

    def body(c, carry):
        start = pl.multiple_of(c * hidden_chunk, hidden_chunk)
        h = jnp.dot(x_ref[...], w1_ref[:, pl.ds(start, hidden_chunk)],
                    preferred_element_type=jnp.float32)
        h = h + b1_ref[:, pl.ds(start, hidden_chunk)]
        a = _apply_act(h, act).astype(w2_ref.dtype)
        acc_ref[...] += jnp.dot(a, w2_ref[pl.ds(start, hidden_chunk), :],
                                preferred_element_type=jnp.float32)
        return carry

    lax.fori_loop(0, num_chunks, body, 0)
    o_ref[...] = (acc_ref[...] + b2_ref[...]).astype(o_ref.dtype)


# ------------------------------- helpers -------------------------------------
def _round_up(a, m):
    return ((a + m - 1) // m) * m


def _round_down(a, m):
    return (a // m) * m


def _sublane_multiple(dtype):
    # f32 -> 8 rows per vreg sublane pack, bf16 -> 16, int8/fp8 -> 32.
    return max(8, 32 // jnp.dtype(dtype).itemsize)


def _tpu_vmem_capacity_bytes():
    try:
        return int(pltpu.get_tpu_info().vmem_capacity_bytes)
    except Exception:
        return 64 * 1024 * 1024  # conservative (v7x-sized) fallback


def _choose_hidden_chunk(hidden_dim, max_chunk=1024):
    """Largest lane-aligned divisor of hidden_dim <= max_chunk (else no chunking)."""
    if hidden_dim <= max_chunk:
        return hidden_dim
    for align in (256, 128):
        c = _round_down(max_chunk, align)
        while c >= align:
            if hidden_dim % c == 0:
                return c
            c -= align
    return hidden_dim


# ---------------------------- parameter prep ---------------------------------
def prepare_vision_mlp_params(fc1_w, fc1_b, fc2_w, fc2_b, compute_dtype):
    """One-time transpose + cast of PyTorch nn.Linear-layout params.

    Hoisted out of the per-call path so the full-weight transpose/convert
    (tens of MB of HBM traffic for real vision MLPs) is not re-emitted per call.
    On v6e/v7x pass compute_dtype=jnp.bfloat16 for native-MXU throughput
    (accumulation / bias / activation stay f32 inside the kernel).
    """
    w1 = jnp.asarray(fc1_w).T.astype(compute_dtype)              # (dim, hidden)
    b1 = jnp.asarray(fc1_b).reshape(1, -1).astype(jnp.float32)   # (1, hidden)
    w2 = jnp.asarray(fc2_w).T.astype(compute_dtype)              # (hidden, dim)
    b2 = jnp.asarray(fc2_b).reshape(1, -1).astype(jnp.float32)   # (1, dim)
    return w1, b1, w2, b2


# ------------------------------- wrapper --------------------------------------
def vision_mlp_prepared(x, w1, b1, w2, b2, hidden_act="quick_gelu", row_tile=512):
    """VisionMlp forward with pre-prepared (kernel-layout) parameters.

    x  : (..., dim)
    w1 : (dim, hidden_dim), b1 : (1, hidden_dim) f32
    w2 : (hidden_dim, dim), b2 : (1, dim) f32
    """
    orig_shape = x.shape
    dim = int(orig_shape[-1])
    hidden_dim = int(w1.shape[1])
    rows = 1
    for d in orig_shape[:-1]:
        rows *= int(d)

    compute_dtype = w1.dtype
    out_dtype = x.dtype               # keep the HBM write stream in x's dtype
    x2d = x.reshape(rows, dim).astype(compute_dtype)

    # ---- per-generation VMEM budget -----------------------------------------
    cap = _tpu_vmem_capacity_bytes()
    if cap >= 100 * 1024 * 1024:       # v5e / v6e: 128 MiB physical VMEM
        vmem_budget = 96 * 1024 * 1024
        vmem_limit = 112 * 1024 * 1024
        two_tensorcores = False
    else:                              # v7x: 64 MiB per TensorCore
        vmem_budget = 48 * 1024 * 1024
        vmem_limit = 56 * 1024 * 1024
        two_tensorcores = True

    # ---- hidden chunking (bounds the live f32 intermediate) -----------------
    hidden_chunk = _choose_hidden_chunk(hidden_dim)
    num_chunks = hidden_dim // hidden_chunk

    x_bytes = jnp.dtype(compute_dtype).itemsize
    o_bytes = jnp.dtype(out_dtype).itemsize
    w_bytes = jnp.dtype(compute_dtype).itemsize
    # Single-buffered resident weights/biases (pl.Buffered(1)).
    resident_bytes = 2 * dim * hidden_dim * w_bytes + (hidden_dim + dim) * 4

    def _tile_bytes(r):
        t = 2 * r * dim * x_bytes          # double-buffered input tile
        t += 2 * r * dim * o_bytes         # double-buffered output tile
        t += r * hidden_chunk * 4          # f32 fc1 slab
        t += r * hidden_chunk * w_bytes    # activation cast feeding the fc2 MXU pass
        if num_chunks > 1:
            t += r * dim * 4               # f32 accumulator scratch
        t += 1 * 1024 * 1024               # slack: bias broadcasts, spills, Mosaic scratch
        return t

    # ---- row-tile selection: MXU-aligned, VMEM-budgeted ----------------------
    sub = _sublane_multiple(compute_dtype)
    mxu_align = 256
    rows_aligned = _round_up(rows, sub)
    rt = max(mxu_align, _round_down(int(row_tile), mxu_align))
    rt = min(rt, rows_aligned)

    while rt > mxu_align and _tile_bytes(rt) + resident_bytes > vmem_budget:
        rt = max(mxu_align, _round_down(rt - 1, mxu_align))
    while rt > sub and _tile_bytes(rt) + resident_bytes > vmem_budget:
        rt -= sub

    # v7x megacore: ensure the "parallel" row axis has >= 2 programs.
    if two_tensorcores and (rows + rt - 1) // rt == 1 and rt >= 2 * mxu_align:
        rt = max(mxu_align, _round_up(rt // 2, mxu_align))

    grid = ((rows + rt - 1) // rt,)

    scratch_shapes = []
    if num_chunks > 1:
        scratch_shapes.append(pltpu.VMEM((rt, dim), jnp.float32))

    cost = pl.CostEstimate(
        flops=4 * rows * dim * hidden_dim,
        transcendentals=rows * hidden_dim,
        bytes_accessed=(rows * dim * (x_bytes + o_bytes)
                        + 2 * dim * hidden_dim * w_bytes
                        + (hidden_dim + dim) * 4),
    )

    kernel = functools.partial(_vision_mlp_kernel, act=hidden_act,
                               hidden_chunk=hidden_chunk, num_chunks=num_chunks)

    def _make_call(single_buffer_weights):
        def const_spec(shape):
            # Constant block index -> VMEM-resident across the whole grid.
            if single_buffer_weights:
                return pl.BlockSpec(shape, lambda i: (0, 0),
                                    pipeline_mode=pl.Buffered(1))
            return pl.BlockSpec(shape, lambda i: (0, 0))

        return pl.pallas_call(
            kernel,
            out_shape=jax.ShapeDtypeStruct((rows, dim), out_dtype),
            grid_spec=pltpu.PrefetchScalarGridSpec(
                num_scalar_prefetch=0,
                grid=grid,
                in_specs=[
                    pl.BlockSpec((rt, dim), lambda i: (i, 0)),
                    const_spec((dim, hidden_dim)),
                    const_spec((1, hidden_dim)),
                    const_spec((hidden_dim, dim)),
                    const_spec((1, dim)),
                ],
                out_specs=pl.BlockSpec((rt, dim), lambda i: (i, 0)),
                scratch_shapes=tuple(scratch_shapes),
            ),
            compiler_params=pltpu.CompilerParams(
                dimension_semantics=("parallel",),
                vmem_limit_bytes=vmem_limit,
            ),
            cost_estimate=cost,
        )

    args = (x2d, w1, b1, w2, b2)
    try:
        out2d = _make_call(True)(*args)
    except Exception:
        # TODO(synk): pipeline_mode=pl.Buffered(1) not supported by this jax
        # version; fall back to default (double-buffered) resident weights.
        out2d = _make_call(False)(*args)

    return out2d.reshape(orig_shape)


def vision_mlp(x, fc1_w, fc1_b, fc2_w, fc2_b, hidden_act="quick_gelu",
               row_tile=512, compute_dtype=None):
    """Convenience wrapper taking PyTorch nn.Linear-layout params.

    NOTE: this re-transposes/casts the weights on every call; for repeated use,
    call prepare_vision_mlp_params() once and vision_mlp_prepared() per step.
    """
    if compute_dtype is None:
        compute_dtype = x.dtype
    params = prepare_vision_mlp_params(fc1_w, fc1_b, fc2_w, fc2_b, compute_dtype)
    return vision_mlp_prepared(x, *params, hidden_act=hidden_act, row_tile=row_tile)


# ------------------------------ reference -------------------------------------
def vision_mlp_ref(x, fc1_w, fc1_b, fc2_w, fc2_b, hidden_act="quick_gelu"):
    xf = x.astype(jnp.float32)
    h = jnp.dot(xf, fc1_w.T.astype(jnp.float32)) + fc1_b.astype(jnp.float32)
    a = _apply_act(h, hidden_act)
    out = jnp.dot(a, fc2_w.T.astype(jnp.float32)) + fc2_b.astype(jnp.float32)
    return out.astype(x.dtype)


if __name__ == "__main__":
    # dim kept a multiple of 128 so output stores are lane-dense.
    batch, seq, dim, hidden_dim = 2, 8, 128, 512
    key = jax.random.PRNGKey(0)
    kx, kw1, kb1, kw2, kb2 = jax.random.split(key, 5)

    x = jax.random.normal(kx, (batch, seq, dim), dtype=jnp.float32)
    fc1_w = 0.05 * jax.random.normal(kw1, (hidden_dim, dim), dtype=jnp.float32)
    fc1_b = 0.05 * jax.random.normal(kb1, (hidden_dim,), dtype=jnp.float32)
    fc2_w = 0.05 * jax.random.normal(kw2, (dim, hidden_dim), dtype=jnp.float32)
    fc2_b = 0.05 * jax.random.normal(kb2, (dim,), dtype=jnp.float32)

    # Parameter prep (transpose + cast) is done ONCE, outside the hot path.
    params = prepare_vision_mlp_params(fc1_w, fc1_b, fc2_w, fc2_b, jnp.float32)
    params = jax.block_until_ready(params)

    out = vision_mlp_prepared(x, *params, hidden_act="quick_gelu")
    out = jax.block_until_ready(out)

    ref = vision_mlp_ref(x, fc1_w, fc1_b, fc2_w, fc2_b, hidden_act="quick_gelu")
    assert out.shape == x.shape
    assert out.dtype == ref.dtype
    # f32-input tolerance; widen if running the bf16 compute path.
    assert jnp.allclose(out, ref, atol=2e-4, rtol=2e-4), "mismatch vs reference"

    print("KERNEL_OK")
</pallas_src>

<mosaic_0001>
module attributes {stable_mosaic.version = 11 : i64} {
  func.func @_vision_mlp_kernel(%arg0: i32, %arg1: memref<16x128xf32, #tpu.memory_space<vmem>>, %arg2: memref<128x512xf32, #tpu.memory_space<vmem>>, %arg3: memref<1x512xf32, #tpu.memory_space<vmem>>, %arg4: memref<512x128xf32, #tpu.memory_space<vmem>>, %arg5: memref<1x128xf32, #tpu.memory_space<vmem>>, %arg6: memref<16x128xf32, #tpu.memory_space<vmem>>) attributes {dimension_semantics = [#tpu.dimension_semantics<parallel>], iteration_bounds = array<i64: 1>, scalar_prefetch = 0 : i64, scratch_operands = 0 : i64, tpu.core_type = #tpu.core_type<tc>, window_params = [{transform_indices = @transform_0, window_bounds = array<i64: 16, 128>}, {pipeline_mode = #tpu.pipeline_mode<synchronous>, transform_indices = @transform_1, window_bounds = array<i64: 128, 512>}, {pipeline_mode = #tpu.pipeline_mode<synchronous>, transform_indices = @transform_2, window_bounds = array<i64: 1, 512>}, {pipeline_mode = #tpu.pipeline_mode<synchronous>, transform_indices = @transform_3, window_bounds = array<i64: 512, 128>}, {pipeline_mode = #tpu.pipeline_mode<synchronous>, transform_indices = @transform_4, window_bounds = array<i64: 1, 128>}, {transform_indices = @transform_5, window_bounds = array<i64: 16, 128>}]} {
    %c0 = arith.constant 0 : index
    %c0_0 = arith.constant 0 : index
    %0 = vector.load %arg1[%c0, %c0_0] : memref<16x128xf32, #tpu.memory_space<vmem>>, vector<16x128xf32>
    %c0_1 = arith.constant 0 : index
    %c0_2 = arith.constant 0 : index
    %1 = vector.load %arg2[%c0_1, %c0_2] : memref<128x512xf32, #tpu.memory_space<vmem>>, vector<128x512xf32>
    %cst = arith.constant dense<0.000000e+00> : vector<16x512xf32>
    %2 = tpu.matmul %0, %1, %cst {dimension_numbers = #tpu.dot_dimension_numbers<[1], [0], [0], [1], [0, 0, 1, 1], [], []>} : vector<16x128xf32>, vector<128x512xf32>, vector<16x512xf32> -> vector<16x512xf32>
    %c0_3 = arith.constant 0 : index
    %c0_4 = arith.constant 0 : index
    %3 = vector.load %arg3[%c0_3, %c0_4] : memref<1x512xf32, #tpu.memory_space<vmem>>, vector<1x512xf32>
    %4 = vector.broadcast %3 : vector<1x512xf32> to vector<16x512xf32>
    %5 = arith.addf %2, %4 : vector<16x512xf32>
    %cst_5 = arith.constant 1.702000e+00 : f32
    %6 = vector.broadcast %cst_5 : f32 to vector<16x512xf32>
    %7 = arith.mulf %6, %5 : vector<16x512xf32>
    %8 = arith.negf %7 : vector<16x512xf32>
    %9 = math.exp %8 : vector<16x512xf32>
    %cst_6 = arith.constant 1.000000e+00 : f32
    %10 = vector.broadcast %cst_6 : f32 to vector<16x512xf32>
    %11 = arith.addf %10, %9 : vector<16x512xf32>
    %12 = arith.divf %10, %11 : vector<16x512xf32>
    %13 = arith.mulf %5, %12 : vector<16x512xf32>
    %c0_7 = arith.constant 0 : index
    %c0_8 = arith.constant 0 : index
    %14 = vector.load %arg4[%c0_7, %c0_8] : memref<512x128xf32, #tpu.memory_space<vmem>>, vector<512x128xf32>
    %cst_9 = arith.constant dense<0.000000e+00> : vector<16x128xf32>
    %15 = tpu.matmul %13, %14, %cst_9 {dimension_numbers = #tpu.dot_dimension_numbers<[1], [0], [0], [1], [0, 0, 1, 1], [], []>} : vector<16x512xf32>, vector<512x128xf32>, vector<16x128xf32> -> vector<16x128xf32>
    %c0_10 = arith.constant 0 : index
    %c0_11 = arith.constant 0 : index
    %16 = vector.load %arg5[%c0_10, %c0_11] : memref<1x128xf32, #tpu.memory_space<vmem>>, vector<1x128xf32>
    %17 = vector.broadcast %16 : vector<1x128xf32> to vector<16x128xf32>
    %18 = arith.addf %15, %17 : vector<16x128xf32>
    %c0_12 = arith.constant 0 : index
    %c0_13 = arith.constant 0 : index
    %19 = vector.load %arg6[%c0_12, %c0_13] : memref<16x128xf32, #tpu.memory_space<vmem>>, vector<16x128xf32>
    tpu.vector_store %arg6[%c0_12, %c0_13], %18 {strides = array<i32>} : memref<16x128xf32, #tpu.memory_space<vmem>>, vector<16x128xf32>,
    return
  }
  func.func @transform_0(%arg0: i32) -> (i32, i32) {
    %c0_i32 = arith.constant 0 : i32
    %c0_i32_0 = arith.constant 0 : i32
    return %arg0, %c0_i32 : i32, i32
  }
  func.func @transform_1(%arg0: i32) -> (i32, i32) {
    %c0_i32 = arith.constant 0 : i32
    %c0_i32_0 = arith.constant 0 : i32
    %c0_i32_1 = arith.constant 0 : i32
    return %c0_i32, %c0_i32_0 : i32, i32
  }
  func.func @transform_2(%arg0: i32) -> (i32, i32) {
    %c0_i32 = arith.constant 0 : i32
    %c0_i32_0 = arith.constant 0 : i32
    %c0_i32_1 = arith.constant 0 : i32
    return %c0_i32, %c0_i32_0 : i32, i32
  }
  func.func @transform_3(%arg0: i32) -> (i32, i32) {
    %c0_i32 = arith.constant 0 : i32
    %c0_i32_0 = arith.constant 0 : i32
    %c0_i32_1 = arith.constant 0 : i32
    return %c0_i32, %c0_i32_0 : i32, i32
  }
  func.func @transform_4(%arg0: i32) -> (i32, i32) {
    %c0_i32 = arith.constant 0 : i32
    %c0_i32_0 = arith.constant 0 : i32
    %c0_i32_1 = arith.constant 0 : i32
    return %c0_i32, %c0_i32_0 : i32, i32
  }
  func.func @transform_5(%arg0: i32) -> (i32, i32) {
    %c0_i32 = arith.constant 0 : i32
    %c0_i32_0 = arith.constant 0 : i32
    return %arg0, %c0_i32 : i32, i32
  }
}

module attributes {stable_mosaic.version = 11 : i64} {
  func.func @_vision_mlp_kernel(%arg0: i32, %arg1: memref<16x128xf32, #tpu.memory_space<vmem>>, %arg2: memref<128x512xf32, #tpu.memory_space<vmem>>, %arg3: memref<1x512xf32, #tpu.memory_space<vmem>>, %arg4: memref<512x128xf32, #tpu.memory_space<vmem>>, %arg5: memref<1x128xf32, #tpu.memory_space<vmem>>, %arg6: memref<16x128xf32, #tpu.memory_space<vmem>>) attributes {dimension_semantics = [#tpu.dimension_semantics<parallel>], iteration_bounds = array<i64: 1>, scalar_prefetch = 0 : i64, scratch_operands = 0 : i64, tpu.core_type = #tpu.core_type<tc>, window_params = [{transform_indices = @transform_0, window_bounds = array<i64: 16, 128>}, {pipeline_mode = #tpu.pipeline_mode<synchronous>, transform_indices = @transform_1, window_bounds = array<i64: 128, 512>}, {pipeline_mode = #tpu.pipeline_mode<synchronous>, transform_indices = @transform_2, window_bounds = array<i64: 1, 512>}, {pipeline_mode = #tpu.pipeline_mode<synchronous>, transform_indices = @transform_3, window_bounds = array<i64: 512, 128>}, {pipeline_mode = #tpu.pipeline_mode<synchronous>, transform_indices = @transform_4, window_bounds = array<i64: 1, 128>}, {transform_indices = @transform_5, window_bounds = array<i64: 16, 128>}]} {
    %c0 = arith.constant 0 : index
    %c0_0 = arith.constant 0 : index
    %0 = vector.load %arg1[%c0, %c0_0] : memref<16x128xf32, #tpu.memory_space<vmem>>, vector<16x128xf32>
    %c0_1 = arith.constant 0 : index
    %c0_2 = arith.constant 0 : index
    %1 = vector.load %arg2[%c0_1, %c0_2] : memref<128x512xf32, #tpu.memory_space<vmem>>, vector<128x512xf32>
    %cst = arith.constant dense<0.000000e+00> : vector<16x512xf32>
    %2 = tpu.matmul %0, %1, %cst {dimension_numbers = #tpu.dot_dimension_numbers<[1], [0], [0], [1], [0, 0, 1, 1], [], []>} : vector<16x128xf32>, vector<128x512xf32>, vector<16x512xf32> -> vector<16x512xf32>
    %c0_3 = arith.constant 0 : index
    %c0_4 = arith.constant 0 : index
    %3 = vector.load %arg3[%c0_3, %c0_4] : memref<1x512xf32, #tpu.memory_space<vmem>>, vector<1x512xf32>
    %4 = vector.broadcast %3 : vector<1x512xf32> to vector<16x512xf32>
    %5 = arith.addf %2, %4 : vector<16x512xf32>
    %cst_5 = arith.constant 1.702000e+00 : f32
    %6 = vector.broadcast %cst_5 : f32 to vector<16x512xf32>
    %7 = arith.mulf %6, %5 : vector<16x512xf32>
    %8 = arith.negf %7 : vector<16x512xf32>
    %9 = math.exp %8 : vector<16x512xf32>
    %cst_6 = arith.constant 1.000000e+00 : f32
    %10 = vector.broadcast %cst_6 : f32 to vector<16x512xf32>
    %11 = arith.addf %10, %9 : vector<16x512xf32>
    %12 = arith.divf %10, %11 : vector<16x512xf32>
    %13 = arith.mulf %5, %12 : vector<16x512xf32>
    %c0_7 = arith.constant 0 : index
    %c0_8 = arith.constant 0 : index
    %14 = vector.load %arg4[%c0_7, %c0_8] : memref<512x128xf32, #tpu.memory_space<vmem>>, vector<512x128xf32>
    %cst_9 = arith.constant dense<0.000000e+00> : vector<16x128xf32>
    %15 = tpu.matmul %13, %14, %cst_9 {dimension_numbers = #tpu.dot_dimension_numbers<[1], [0], [0], [1], [0, 0, 1, 1], [], []>} : vector<16x512xf32>, vector<512x128xf32>, vector<16x128xf32> -> vector<16x128xf32>
    %c0_10 = arith.constant 0 : index
    %c0_11 = arith.constant 0 : index
    %16 = vector.load %arg5[%c0_10, %c0_11] : memref<1x128xf32, #tpu.memory_space<vmem>>, vector<1x128xf32>
    %17 = vector.broadcast %16 : vector<1x128xf32> to vector<16x128xf32>
    %18 = arith.addf %15, %17 : vector<16x128xf32>
    %c0_12 = arith.constant 0 : index
    %c0_13 = arith.constant 0 : index
    %19 = vector.load %arg6[%c0_12, %c0_13] : memref<16x128xf32, #tpu.memory_space<vmem>>, vector<16x128xf32>
    tpu.vector_store %arg6[%c0_12, %c0_13], %18 {strides = array<i32>} : memref<16x128xf32, #tpu.memory_space<vmem>>, vector<16x128xf32>,
    return
  }
  func.func @transform_0(%arg0: i32) -> (i32, i32) {
    %c0_i32 = arith.constant 0 : i32
    %c0_i32_0 = arith.constant 0 : i32
    return %arg0, %c0_i32 : i32, i32
  }
  func.func @transform_1(%arg0: i32) -> (i32, i32) {
    %c0_i32 = arith.constant 0 : i32
    %c0_i32_0 = arith.constant 0 : i32
    %c0_i32_1 = arith.constant 0 : i32
    return %c0_i32, %c0_i32_0 : i32, i32
  }
  func.func @transform_2(%arg0: i32) -> (i32, i32) {
    %c0_i32 = arith.constant 0 : i32
    %c0_i32_0 = arith.constant 0 : i32
    %c0_i32_1 = arith.constant 0 : i32
    return %c0_i32, %c0_i32_0 : i32, i32
  }
  func.func @transform_3(%arg0: i32) -> (i32, i32) {
    %c0_i32 = arith.constant 0 : i32
    %c0_i32_0 = arith.constant 0 : i32
    %c0_i32_1 = arith.constant 0 : i32
    return %c0_i32, %c0_i32_0 : i32, i32
  }
  func.func @transform_4(%arg0: i32) -> (i32, i32) {
    %c0_i32 = arith.constant 0 : i32
    %c0_i32_0 = arith.constant 0 : i32
    %c0_i32_1 = arith.constant 0 : i32
    return %c0_i32, %c0_i32_0 : i32, i32
  }
  func.func @transform_5(%arg0: i32) -> (i32, i32) {
    %c0_i32 = arith.constant 0 : i32
    %c0_i32_0 = arith.constant 0 : i32
    return %arg0, %c0_i32 : i32, i32
  }
}

</mosaic_0001>

<llo_original>
// kernel: tpu_custom_call.1
$region0: #{tpu_custom_call.1}
  #allocation0 [shape = 'u32[]', space=smem, size = 0x4, offset = 0x4, fixed_abs, tag = 'smem constant byte address 0x4 - core index']
  #allocation1 [shape = 'u32[144,128]{1,0:T(1,128)}', space=vmem, size = 0x12000, scoped, tag = 'internal scratch']
  %s0 = inlined_call_operand.hbm [shape: f32[16,128], index: 0, kind: input, shape index: {}]
  %s1 = inlined_call_operand.hbm [shape: f32[128,512], index: 1, kind: input, shape index: {}]
  %s2 = inlined_call_operand.hbm [shape: f32[1,512], index: 2, kind: input, shape index: {}]
  %s3 = inlined_call_operand.hbm [shape: f32[512,128], index: 3, kind: input, shape index: {}]
  %s4 = inlined_call_operand.vmem [shape: f32[1,128], index: 4, kind: input, shape index: {}]
  %s5 = inlined_call_operand.hbm [shape: f32[16,128], index: 5, kind: output, shape index: {}]
  %s6 = sld [smem:[#allocation0]]
  $region46: #{tpu_custom_call.1} parent=0
    _
  %s8 = ssub.s32 1, %s6
  %s9 = scalar_select 0, %s8, %s6
  $region1: #{tpu_custom_call.1} parent=0
    #allocation2 [shape = 'u8[8192]{0}', space=vmem, size = 0x2000, scoped, tag = 'input window, operand 0, single buffered']
    #allocation3 [shape = 's32[1]{0}', space=sflag, size = 0x4, scoped, tag = 'scoped memory for tpu_custom_call.1']
    #allocation4 [shape = 's32[1]{0}', space=sflag, size = 0x4, scoped, tag = 'scoped memory for tpu_custom_call.1']
    #allocation5 [shape = 'u8[262144]{0}', space=vmem, size = 0x40000, scoped, tag = 'input window, operand 1, single buffered']
    #allocation6 [shape = 's32[1]{0}', space=sflag, size = 0x4, scoped, tag = 'scoped memory for tpu_custom_call.1']
    #allocation7 [shape = 'u8[2048]{0}', space=vmem, size = 0x800, scoped, tag = 'input window, operand 2, single buffered']
    #allocation8 [shape = 'u8[262144]{0}', space=vmem, size = 0x40000, scoped, tag = 'input window, operand 3, single buffered']
    #allocation9 [shape = 's32[1]{0}', space=sflag, size = 0x4, scoped, tag = 'scoped memory for tpu_custom_call.1']
    #allocation10 [shape = 'u8[8192]{0}', space=vmem, size = 0x2000, scoped, tag = 'output window, operand 0, single buffered']
    %10 = vsyncpa [#allocation3], 0
    %11 = vsyncpa [#allocation6], 0
    %12 = vsyncpa [#allocation9], 0
    %13 = vsyncpa [#allocation4], 0
    // Predicated region
    $region2: #{tpu_custom_call.1} parent=1 // pred_check
      _
    $region3: #{tpu_custom_call.1} parent=1 // pred_check_branch
      %15 = sbr.rel (0) target = $region5
    $region4: #{tpu_custom_call.1} parent=1 // pred_region
      %s17 = ssub.s32 256, 256
      %18 = vsyncadd [#allocation3], %s17
      %s19 = sshll.u32 [#allocation2], 4
      %s20 = int_to_ptr.vmem [resolvable:$true] %s19
      %25 = dma.hbm_to_vmem [thread:$0]  %s0, 256, %s20, [#allocation3], 128, 128, 8
    $region5: #{tpu_custom_call.1} parent=1 // pred_fallthru
      _
    // Predicated region
    $region6: #{tpu_custom_call.1} parent=1 // pred_check
      _
    $region7: #{tpu_custom_call.1} parent=1 // pred_check_branch
      %27 = sbr.rel (0) target = $region9
    $region8: #{tpu_custom_call.1} parent=1 // pred_region
      %s29 = ssub.s32 8192, 8192
      %30 = vsyncadd [#allocation6], %s29
      %s31 = sshll.u32 [#allocation5], 4
      %s32 = int_to_ptr.vmem [resolvable:$true] %s31
      %37 = dma.hbm_to_vmem [thread:$0]  %s1, 8192, %s32, [#allocation6], 512, 512, 32
    $region9: #{tpu_custom_call.1} parent=1 // pred_fallthru
      _
    // Predicated region
    $region10: #{tpu_custom_call.1} parent=1 // pred_check
      _
    $region11: #{tpu_custom_call.1} parent=1 // pred_check_branch
      %39 = sbr.rel (0) target = $region13
    $region12: #{tpu_custom_call.1} parent=1 // pred_region
      %s41 = ssub.s32 64, 64
      %42 = vsyncadd [#allocation6], %s41
      %s44 = sshll.u32 [#allocation7], 4
      %s45 = int_to_ptr.vmem [resolvable:$true] %s44
      %47 = dma.hbm_to_vmem [thread:$0]  %s2, 64, %s45, [#allocation6]
    $region13: #{tpu_custom_call.1} parent=1 // pred_fallthru
      _
    // Predicated region
    $region14: #{tpu_custom_call.1} parent=1 // pred_check
      _
    $region15: #{tpu_custom_call.1} parent=1 // pred_check_branch
      %49 = sbr.rel (0) target = $region17
    $region16: #{tpu_custom_call.1} parent=1 // pred_region
      %s51 = ssub.s32 8192, 8192
      %52 = vsyncadd [#allocation9], %s51
      %s53 = sshll.u32 [#allocation8], 4
      %s54 = int_to_ptr.vmem [resolvable:$true] %s53
      %59 = dma.hbm_to_vmem [thread:$0]  %s3, 8192, %s54, [#allocation9], 128, 128, 8
    $region17: #{tpu_custom_call.1} parent=1 // pred_fallthru
      _
    // Predicated region
    $region18: #{tpu_custom_call.1} parent=1 // pred_check
      _
    $region19: #{tpu_custom_call.1} parent=1 // pred_check_branch
      %61 = sbr.rel (0) target = $region21
    $region20: #{tpu_custom_call.1} parent=1 // pred_region
      _
    $region21: #{tpu_custom_call.1} parent=1 // pred_fallthru
      _
    // Predicated region
    $region22: #{tpu_custom_call.1} parent=1 // pred_check
      _
    $region23: #{tpu_custom_call.1} parent=1 // pred_check_branch
      %63 = sbr.rel (0) target = $region25
    $region24: #{tpu_custom_call.1} parent=1 // pred_region
      %64 = dma.done [#allocation3], 256
    $region25: #{tpu_custom_call.1} parent=1 // pred_fallthru
      _
    // Predicated region
    $region26: #{tpu_custom_call.1} parent=1 // pred_check
      _
    $region27: #{tpu_custom_call.1} parent=1 // pred_check_branch
      %66 = sbr.rel (0) target = $region29
    $region28: #{tpu_custom_call.1} parent=1 // pred_region
      %67 = dma.done [#allocation6], 8192
    $region29: #{tpu_custom_call.1} parent=1 // pred_fallthru
      _
    // Predicated region
    $region30: #{tpu_custom_call.1} parent=1 // pred_check
      _
    $region31: #{tpu_custom_call.1} parent=1 // pred_check_branch
      %69 = sbr.rel (0) target = $region33
    $region32: #{tpu_custom_call.1} parent=1 // pred_region
      %70 = dma.done [#allocation6], 64
    $region33: #{tpu_custom_call.1} parent=1 // pred_fallthru
      _
    // Predicated region
    $region34: #{tpu_custom_call.1} parent=1 // pred_check
      _
    $region35: #{tpu_custom_call.1} parent=1 // pred_check_branch
      %72 = sbr.rel (0) target = $region37
    $region36: #{tpu_custom_call.1} parent=1 // pred_region
      %73 = dma.done [#allocation9], 8192
    $region37: #{tpu_custom_call.1} parent=1 // pred_fallthru
      _
    %v74 = vld [vmem:[#allocation2] sm:$0xff]
    %v75 = vld [vmem:[#allocation2 + $0x8] sm:$0xff]
    %v76 = vld [vmem:[#allocation5] sm:$0xff]
    %v77 = vld [vmem:[#allocation5 + $0x8] sm:$0xff]
    %v78 = vld [vmem:[#allocation5 + $0x10] sm:$0xff]
    %v79 = vld [vmem:[#allocation5 + $0x18] sm:$0xff]
    %v80 = vld [vmem:[#allocation5 + $0x20] sm:$0xff]
    %v81 = vld [vmem:[#allocation5 + $0x28] sm:$0xff]
    %v82 = vld [vmem:[#allocation5 + $0x30] sm:$0xff]
    %v83 = vld [vmem:[#allocation5 + $0x38] sm:$0xff]
    %v84 = vld [vmem:[#allocation5 + $0x40] sm:$0xff]
    %v85 = vld [vmem:[#allocation5 + $0x48] sm:$0xff]
    %v86 = vld [vmem:[#allocation5 + $0x50] sm:$0xff]
    %v87 = vld [vmem:[#allocation5 + $0x58] sm:$0xff]
    %v88 = vld [vmem:[#allocation5 + $0x60] sm:$0xff]
    %v89 = vld [vmem:[#allocation5 + $0x68] sm:$0xff]
    %v90 = vld [vmem:[#allocation5 + $0x70] sm:$0xff]
    %v91 = vld [vmem:[#allocation5 + $0x78] sm:$0xff]
    %v92 = vld [vmem:[#allocation5 + $0x80] sm:$0xff]
    %v93 = vld [vmem:[#allocation5 + $0x88] sm:$0xff]
    %v94 = vld [vmem:[#allocation5 + $0x90] sm:$0xff]
    %v95 = vld [vmem:[#allocation5 + $0x98] sm:$0xff]
    %v96 = vld [vmem:[#allocation5 + $0xa0] sm:$0xff]
    %v97 = vld [vmem:[#allocation5 + $0xa8] sm:$0xff]
    %v98 = vld [vmem:[#allocation5 + $0xb0] sm:$0xff]
    %v99 = vld [vmem:[#allocation5 + $0xb8] sm:$0xff]
    %v100 = vld [vmem:[#allocation5 + $0xc0] sm:$0xff]
    %v101 = vld [vmem:[#allocation5 + $0xc8] sm:$0xff]
    %v102 = vld [vmem:[#allocation5 + $0xd0] sm:$0xff]
    %v103 = vld [vmem:[#allocation5 + $0xd8] sm:$0xff]
    %v104 = vld [vmem:[#allocation5 + $0xe0] sm:$0xff]
    %v105 = vld [vmem:[#allocation5 + $0xe8] sm:$0xff]
    %v106 = vld [vmem:[#allocation5 + $0xf0] sm:$0xff]
    %v107 = vld [vmem:[#allocation5 + $0xf8] sm:$0xff]
    %v108 = vld [vmem:[#allocation5 + $0x100] sm:$0xff]
    %v109 = vld [vmem:[#allocation5 + $0x108] sm:$0xff]
    %v110 = vld [vmem:[#allocation5 + $0x110] sm:$0xff]
    %v111 = vld [vmem:[#allocation5 + $0x118] sm:$0xff]
    %v112 = vld [vmem:[#allocation5 + $0x120] sm:$0xff]
    %v113 = vld [vmem:[#allocation5 + $0x128] sm:$0xff]
    %v114 = vld [vmem:[#allocation5 + $0x130] sm:$0xff]
    %v115 = vld [vmem:[#allocation5 + $0x138] sm:$0xff]
    %v116 = vld [vmem:[#allocation5 + $0x140] sm:$0xff]
    %v117 = vld [vmem:[#allocation5 + $0x148] sm:$0xff]
    %v118 = vld [vmem:[#allocation5 + $0x150] sm:$0xff]
    %v119 = vld [vmem:[#allocation5 + $0x158] sm:$0xff]
    %v120 = vld [vmem:[#allocation5 + $0x160] sm:$0xff]
    %v121 = vld [vmem:[#allocation5 + $0x168] sm:$0xff]
    %v122 = vld [vmem:[#allocation5 + $0x170] sm:$0xff]
    %v123 = vld [vmem:[#allocation5 + $0x178] sm:$0xff]
    %v124 = vld [vmem:[#allocation5 + $0x180] sm:$0xff]
    %v125 = vld [vmem:[#allocation5 + $0x188] sm:$0xff]
    %v126 = vld [vmem:[#allocation5 + $0x190] sm:$0xff]
    %v127 = vld [vmem:[#allocation5 + $0x198] sm:$0xff]
    %v128 = vld [vmem:[#allocation5 + $0x1a0] sm:$0xff]
    %v129 = vld [vmem:[#allocation5 + $0x1a8] sm:$0xff]
    %v130 = vld [vmem:[#allocation5 + $0x1b0] sm:$0xff]
    %v131 = vld [vmem:[#allocation5 + $0x1b8] sm:$0xff]
    %v132 = vld [vmem:[#allocation5 + $0x1c0] sm:$0xff]
    %v133 = vld [vmem:[#allocation5 + $0x1c8] sm:$0xff]
    %v134 = vld [vmem:[#allocation5 + $0x1d0] sm:$0xff]
    %v135 = vld [vmem:[#allocation5 + $0x1d8] sm:$0xff]
    %v136 = vld [vmem:[#allocation5 + $0x1e0] sm:$0xff]
    %v137 = vld [vmem:[#allocation5 + $0x1e8] sm:$0xff]
    %v138 = vld [vmem:[#allocation5 + $0x1f0] sm:$0xff]
    %v139 = vld [vmem:[#allocation5 + $0x1f8] sm:$0xff]
    %v140 = vld [vmem:[#allocation7] sm:$0xf]
    %v142 = vlaneseq
    %v143 = vshrl.u32 %v142, 7
    %v144 = vsub.s32 0, %v143
    %v145 = vrot.slane %v140, %v144
    %v146 = vlaneseq
    %v147 = vshrl.u32 %v146, 7
    %v148 = vsub.s32 1, %v147
    %v149 = vrot.slane %v140, %v148
    %v150 = vlaneseq
    %v151 = vshrl.u32 %v150, 7
    %v152 = vsub.s32 2, %v151
    %v153 = vrot.slane %v140, %v152
    %v154 = vlaneseq
    %v155 = vshrl.u32 %v154, 7
    %v156 = vsub.s32 3, %v155
    %v157 = vrot.slane %v140, %v156
    %162 = vmatprep.subr.mxu0 %v137
    %163 = vmatpush1.msra.mxu0 %v136
    %164 = vmatprep.subr.mxu0 %v133
    %165 = vmatpush1.msra.mxu0 %v132
    %166 = vmatprep.subr.mxu0 %v129
    %167 = vmatpush1.msra.mxu0 %v128
    %168 = vmatprep.subr.mxu0 %v125
    %169 = vmatpush1.msra.mxu0 %v124
    %170 = vmatprep.subr.mxu0 %v121
    %171 = vmatpush1.msra.mxu0 %v120
    %172 = vmatprep.subr.mxu0 %v117
    %173 = vmatpush1.msra.mxu0 %v116
    %174 = vmatprep.subr.mxu0 %v113
    %175 = vmatpush1.msra.mxu0 %v112
    %176 = vmatprep.subr.mxu0 %v109
    %177 = vmatpush1.msra.mxu0 %v108
    %178 = vmatprep.subr.mxu0 %v105
    %179 = vmatpush1.msra.mxu0 %v104
    %180 = vmatprep.subr.mxu0 %v101
    %181 = vmatpush1.msra.mxu0 %v100
    %182 = vmatprep.subr.mxu0 %v97
    %183 = vmatpush1.msra.mxu0 %v96
    %184 = vmatprep.subr.mxu0 %v93
    %185 = vmatpush1.msra.mxu0 %v92
    %186 = vmatprep.subr.mxu0 %v89
    %187 = vmatpush1.msra.mxu0 %v88
    %188 = vmatprep.subr.mxu0 %v85
    %189 = vmatpush1.msra.mxu0 %v84
    %190 = vmatprep.subr.mxu0 %v81
    %191 = vmatpush1.msra.mxu0 %v80
    %192 = vmatprep.subr.mxu0 %v77
    %193 = vmatpush1.msra.mxu0 %v76
    %194 = vmatprep.subr.mxu0 0.0
    %195 = vmatpush2.msra.mxu0 0.0
    %196 = vmatprep.subr.mxu0 0.0
    %197 = vmatpush2.msra.mxu0 0.0
    %198 = vmatprep.subr.mxu0 0.0
    %199 = vmatpush2.msra.mxu0 0.0
    %200 = vmatprep.subr.mxu0 0.0
    %201 = vmatpush2.msra.mxu0 0.0
    %202 = vmatprep.subr.mxu0 0.0
    %203 = vmatpush2.msra.mxu0 0.0
    %204 = vmatprep.subr.mxu0 0.0
    %205 = vmatpush2.msra.mxu0 0.0
    %206 = vmatprep.subr.mxu0 0.0
    %207 = vmatpush2.msra.mxu0 0.0
    %208 = vmatprep.subr.mxu0 0.0
    %209 = vmatpush2.msra.mxu0 0.0
    %210 = vmatprep.subr.mxu0 0.0
    %211 = vmatpush2.msra.mxu0 0.0
    %212 = vmatprep.subr.mxu0 0.0
    %213 = vmatpush2.msra.mxu0 0.0
    %214 = vmatprep.subr.mxu0 0.0
    %215 = vmatpush2.msra.mxu0 0.0
    %216 = vmatprep.subr.mxu0 0.0
    %217 = vmatpush2.msra.mxu0 0.0
    %218 = vmatprep.subr.mxu0 0.0
    %219 = vmatpush2.msra.mxu0 0.0
    %220 = vmatprep.subr.mxu0 0.0
    %221 = vmatpush2.msra.mxu0 0.0
    %222 = vmatprep.subr.mxu0 0.0
    %223 = vmatpush2.msra.mxu0 0.0
    %224 = vmatprep.subr.mxu0 0.0
    %225 = vmatpush2.msra.mxu0 0.0
    %226 = vmatprep.mubr.f32.mxu0 0.0
    %227 = vmatmul.mubr.f32.gmra.mxu0 %v74
    %v228 = vpop.f32.mrf.mxu0
    %v229 = vadd.f32 %v145, %v228
    %v230 = vpop.f32.mrf.mxu0
    %v231 = vadd.f32 %v149, %v230
    %232 = vmatprep.mubr.f32.mxu0 0.0
    %233 = vmatmul.mubr.f32.gmra.mxu0 %v75
    %v234 = vpop.f32.mrf.mxu0
    %v235 = vadd.f32 %v145, %v234
    %v236 = vpop.f32.mrf.mxu0
    %v237 = vadd.f32 %v149, %v236
    %238 = vdwg.mxu0
    %239 = vmatprep.subr.mxu0 %v139
    %240 = vmatpush1.msra.mxu0 %v138
    %241 = vmatprep.subr.mxu0 %v135
    %242 = vmatpush1.msra.mxu0 %v134
    %243 = vmatprep.subr.mxu0 %v131
    %244 = vmatpush1.msra.mxu0 %v130
    %245 = vmatprep.subr.mxu0 %v127
    %246 = vmatpush1.msra.mxu0 %v126
    %247 = vmatprep.subr.mxu0 %v123
    %248 = vmatpush1.msra.mxu0 %v122
    %249 = vmatprep.subr.mxu0 %v119
    %250 = vmatpush1.msra.mxu0 %v118
    %251 = vmatprep.subr.mxu0 %v115
    %252 = vmatpush1.msra.mxu0 %v114
    %253 = vmatprep.subr.mxu0 %v111
    %254 = vmatpush1.msra.mxu0 %v110
    %255 = vmatprep.subr.mxu0 %v107
    %256 = vmatpush1.msra.mxu0 %v106
    %257 = vmatprep.subr.mxu0 %v103
    %258 = vmatpush1.msra.mxu0 %v102
    %259 = vmatprep.subr.mxu0 %v99
    %260 = vmatpush1.msra.mxu0 %v98
    %261 = vmatprep.subr.mxu0 %v95
    %262 = vmatpush1.msra.mxu0 %v94
    %263 = vmatprep.subr.mxu0 %v91
    %264 = vmatpush1.msra.mxu0 %v90
    %265 = vmatprep.subr.mxu0 %v87
    %266 = vmatpush1.msra.mxu0 %v86
    %267 = vmatprep.subr.mxu0 %v83
    %268 = vmatpush1.msra.mxu0 %v82
    %269 = vmatprep.subr.mxu0 %v79
    %270 = vmatpush1.msra.mxu0 %v78
    %271 = vmatprep.subr.mxu0 0.0
    %272 = vmatpush2.msra.mxu0 0.0
    %273 = vmatprep.subr.mxu0 0.0
    %274 = vmatpush2.msra.mxu0 0.0
    %275 = vmatprep.subr.mxu0 0.0
    %276 = vmatpush2.msra.mxu0 0.0
    %277 = vmatprep.subr.mxu0 0.0
    %278 = vmatpush2.msra.mxu0 0.0
    %279 = vmatprep.subr.mxu0 0.0
    %280 = vmatpush2.msra.mxu0 0.0
    %281 = vmatprep.subr.mxu0 0.0
    %282 = vmatpush2.msra.mxu0 0.0
    %283 = vmatprep.subr.mxu0 0.0
    %284 = vmatpush2.msra.mxu0 0.0
    %285 = vmatprep.subr.mxu0 0.0
    %286 = vmatpush2.msra.mxu0 0.0
    %287 = vmatprep.subr.mxu0 0.0
    %288 = vmatpush2.msra.mxu0 0.0
    %289 = vmatprep.subr.mxu0 0.0
    %290 = vmatpush2.msra.mxu0 0.0
    %291 = vmatprep.subr.mxu0 0.0
    %292 = vmatpush2.msra.mxu0 0.0
    %293 = vmatprep.subr.mxu0 0.0
    %294 = vmatpush2.msra.mxu0 0.0
    %295 = vmatprep.subr.mxu0 0.0
    %296 = vmatpush2.msra.mxu0 0.0
    %297 = vmatprep.subr.mxu0 0.0
    %298 = vmatpush2.msra.mxu0 0.0
    %299 = vmatprep.subr.mxu0 0.0
    %300 = vmatpush2.msra.mxu0 0.0
    %301 = vmatprep.subr.mxu0 0.0
    %302 = vmatpush2.msra.mxu0 0.0
    %303 = vmatprep.mubr.f32.mxu0 0.0
    %304 = vmatmul.mubr.f32.gmra.mxu0 %v74
    %v305 = vpop.f32.mrf.mxu0
    %v306 = vadd.f32 %v153, %v305
    %v307 = vpop.f32.mrf.mxu0
    %v308 = vadd.f32 %v157, %v307
    %309 = vmatprep.mubr.f32.mxu0 0.0
    %310 = vmatmul.mubr.f32.gmra.mxu0 %v75
    %v311 = vpop.f32.mrf.mxu0
    %v312 = vadd.f32 %v153, %v311
    %v313 = vpop.f32.mrf.mxu0
    %v314 = vadd.f32 %v157, %v313
    %315 = vdwg.mxu0
    %v316 = vmul.f32 %v229, 1.702
    %v317 = vmul.f32 %v231, 1.702
    %v318 = vmul.f32 %v306, 1.702
    %v319 = vmul.f32 %v308, 1.702
    %v320 = vmul.f32 %v235, 1.702
    %v321 = vmul.f32 %v237, 1.702
    %v322 = vmul.f32 %v312, 1.702
    %v323 = vmul.f32 %v314, 1.702
    %v324 = vxor.u32 %v316, 2147483648
    %v325 = vxor.u32 %v317, 2147483648
    %v326 = vxor.u32 %v318, 2147483648
    %v327 = vxor.u32 %v319, 2147483648
    %v328 = vxor.u32 %v320, 2147483648
    %v329 = vxor.u32 %v321, 2147483648
    %v330 = vxor.u32 %v322, 2147483648
    %v331 = vxor.u32 %v323, 2147483648
    %v332 = vmul.f32 %v324, 1.442695
    %v333 = vpow.pop %v332
    %v334 = vmul.f32 %v325, 1.442695
    %v335 = vpow.pop %v334
    %v336 = vmul.f32 %v326, 1.442695
    %v337 = vpow.pop %v336
    %v338 = vmul.f32 %v327, 1.442695
    %v339 = vpow.pop %v338
    %v340 = vmul.f32 %v328, 1.442695
    %v341 = vpow.pop %v340
    %v342 = vmul.f32 %v329, 1.442695
    %v343 = vpow.pop %v342
    %v344 = vmul.f32 %v330, 1.442695
    %v345 = vpow.pop %v344
    %v346 = vmul.f32 %v331, 1.442695
    %v347 = vpow.pop %v346
    %v348 = vadd.f32 %v333, 1.0
    %v349 = vadd.f32 %v335, 1.0
    %v350 = vadd.f32 %v337, 1.0
    %v351 = vadd.f32 %v339, 1.0
    %v352 = vadd.f32 %v341, 1.0
    %v353 = vadd.f32 %v343, 1.0
    %v354 = vadd.f32 %v345, 1.0
    %v355 = vadd.f32 %v347, 1.0
    %v356 = vrcp.pop %v348
    %v357 = vmul.f32 1.0, %v356
    %v358 = vrcp.pop %v349
    %v359 = vmul.f32 1.0, %v358
    %v360 = vrcp.pop %v350
    %v361 = vmul.f32 1.0, %v360
    %v362 = vrcp.pop %v351
    %v363 = vmul.f32 1.0, %v362
    %v364 = vrcp.pop %v352
    %v365 = vmul.f32 1.0, %v364
    %v366 = vrcp.pop %v353
    %v367 = vmul.f32 1.0, %v366
    %v368 = vrcp.pop %v354
    %v369 = vmul.f32 1.0, %v368
    %v370 = vrcp.pop %v355
    %v371 = vmul.f32 1.0, %v370
    %v372 = vmul.f32 %v229, %v357
    %v373 = vmul.f32 %v231, %v359
    %v374 = vmul.f32 %v306, %v361
    %v375 = vmul.f32 %v308, %v363
    %v376 = vmul.f32 %v235, %v365
    %v377 = vmul.f32 %v237, %v367
    %v378 = vmul.f32 %v312, %v369
    %v379 = vmul.f32 %v314, %v371
    %v380 = vld [vmem:[#allocation8] sm:$0xff]
    %v381 = vld [vmem:[#allocation8 + $0x8] sm:$0xff]
    %v382 = vld [vmem:[#allocation8 + $0x10] sm:$0xff]
    %v383 = vld [vmem:[#allocation8 + $0x18] sm:$0xff]
    %v384 = vld [vmem:[#allocation8 + $0x20] sm:$0xff]
    %v385 = vld [vmem:[#allocation8 + $0x28] sm:$0xff]
    %v386 = vld [vmem:[#allocation8 + $0x30] sm:$0xff]
    %v387 = vld [vmem:[#allocation8 + $0x38] sm:$0xff]
    %v388 = vld [vmem:[#allocation8 + $0x40] sm:$0xff]
    %v389 = vld [vmem:[#allocation8 + $0x48] sm:$0xff]
    %v390 = vld [vmem:[#allocation8 + $0x50] sm:$0xff]
    %v391 = vld [vmem:[#allocation8 + $0x58] sm:$0xff]
    %v392 = vld [vmem:[#allocation8 + $0x60] sm:$0xff]
    %v393 = vld [vmem:[#allocation8 + $0x68] sm:$0xff]
    %v394 = vld [vmem:[#allocation8 + $0x70] sm:$0xff]
    %v395 = vld [vmem:[#allocation8 + $0x78] sm:$0xff]
    %v396 = vld [vmem:[#allocation8 + $0x80] sm:$0xff]
    %v397 = vld [vmem:[#allocation8 + $0x88] sm:$0xff]
    %v398 = vld [vmem:[#allocation8 + $0x90] sm:$0xff]
    %v399 = vld [vmem:[#allocation8 + $0x98] sm:$0xff]
    %v400 = vld [vmem:[#allocation8 + $0xa0] sm:$0xff]
    %v401 = vld [vmem:[#allocation8 + $0xa8] sm:$0xff]
    %v402 = vld [vmem:[#allocation8 + $0xb0] sm:$0xff]
    %v403 = vld [vmem:[#allocation8 + $0xb8] sm:$0xff]
    %v404 = vld [vmem:[#allocation8 + $0xc0] sm:$0xff]
    %v405 = vld [vmem:[#allocation8 + $0xc8] sm:$0xff]
    %v406 = vld [vmem:[#allocation8 + $0xd0] sm:$0xff]
    %v407 = vld [vmem:[#allocation8 + $0xd8] sm:$0xff]
    %v408 = vld [vmem:[#allocation8 + $0xe0] sm:$0xff]
    %v409 = vld [vmem:[#allocation8 + $0xe8] sm:$0xff]
    %v410 = vld [vmem:[#allocation8 + $0xf0] sm:$0xff]
    %v411 = vld [vmem:[#allocation8 + $0xf8] sm:$0xff]
    %v412 = vld [vmem:[#allocation8 + $0x100] sm:$0xff]
    %v413 = vld [vmem:[#allocation8 + $0x108] sm:$0xff]
    %v414 = vld [vmem:[#allocation8 + $0x110] sm:$0xff]
    %v415 = vld [vmem:[#allocation8 + $0x118] sm:$0xff]
    %v416 = vld [vmem:[#allocation8 + $0x120] sm:$0xff]
    %v417 = vld [vmem:[#allocation8 + $0x128] sm:$0xff]
    %v418 = vld [vmem:[#allocation8 + $0x130] sm:$0xff]
    %v419 = vld [vmem:[#allocation8 + $0x138] sm:$0xff]
    %v420 = vld [vmem:[#allocation8 + $0x140] sm:$0xff]
    %v421 = vld [vmem:[#allocation8 + $0x148] sm:$0xff]
    %v422 = vld [vmem:[#allocation8 + $0x150] sm:$0xff]
    %v423 = vld [vmem:[#allocation8 + $0x158] sm:$0xff]
    %v424 = vld [vmem:[#allocation8 + $0x160] sm:$0xff]
    %v425 = vld [vmem:[#allocation8 + $0x168] sm:$0xff]
    %v426 = vld [vmem:[#allocation8 + $0x170] sm:$0xff]
    %v427 = vld [vmem:[#allocation8 + $0x178] sm:$0xff]
    %v428 = vld [vmem:[#allocation8 + $0x180] sm:$0xff]
    %v429 = vld [vmem:[#allocation8 + $0x188] sm:$0xff]
    %v430 = vld [vmem:[#allocation8 + $0x190] sm:$0xff]
    %v431 = vld [vmem:[#allocation8 + $0x198] sm:$0xff]
    %v432 = vld [vmem:[#allocation8 + $0x1a0] sm:$0xff]
    %v433 = vld [vmem:[#allocation8 + $0x1a8] sm:$0xff]
    %v434 = vld [vmem:[#allocation8 + $0x1b0] sm:$0xff]
    %v435 = vld [vmem:[#allocation8 + $0x1b8] sm:$0xff]
    %v436 = vld [vmem:[#allocation8 + $0x1c0] sm:$0xff]
    %v437 = vld [vmem:[#allocation8 + $0x1c8] sm:$0xff]
    %v438 = vld [vmem:[#allocation8 + $0x1d0] sm:$0xff]
    %v439 = vld [vmem:[#allocation8 + $0x1d8] sm:$0xff]
    %v440 = vld [vmem:[#allocation8 + $0x1e0] sm:$0xff]
    %v441 = vld [vmem:[#allocation8 + $0x1e8] sm:$0xff]
    %v442 = vld [vmem:[#allocation8 + $0x1f0] sm:$0xff]
    %v443 = vld [vmem:[#allocation8 + $0x1f8] sm:$0xff]
    %v444 = vld [vmem:[%s4] sm:$0x1]
    %v446 = vlaneseq
    %v447 = vshrl.u32 %v446, 7
    %v448 = vsub.s32 0, %v447
    %v449 = vrot.slane %v444, %v448
    %451 = vmatprep.subr.mxu0 0.0
    %452 = vmatpush1.msra.mxu0 %v395
    %453 = vmatprep.subr.mxu0 0.0
    %454 = vmatpush1.msra.mxu0 %v394
    %455 = vmatprep.subr.mxu0 0.0
    %456 = vmatpush1.msra.mxu0 %v393
    %457 = vmatprep.subr.mxu0 0.0
    %458 = vmatpush1.msra.mxu0 %v392
    %459 = vmatprep.subr.mxu0 0.0
    %460 = vmatpush1.msra.mxu0 %v391
    %461 = vmatprep.subr.mxu0 0.0
    %462 = vmatpush1.msra.mxu0 %v390
    %463 = vmatprep.subr.mxu0 0.0
    %464 = vmatpush1.msra.mxu0 %v389
    %465 = vmatprep.subr.mxu0 0.0
    %466 = vmatpush1.msra.mxu0 %v388
    %467 = vmatprep.subr.mxu0 0.0
    %468 = vmatpush1.msra.mxu0 %v387
    %469 = vmatprep.subr.mxu0 0.0
    %470 = vmatpush1.msra.mxu0 %v386
    %471 = vmatprep.subr.mxu0 0.0
    %472 = vmatpush1.msra.mxu0 %v385
    %473 = vmatprep.subr.mxu0 0.0
    %474 = vmatpush1.msra.mxu0 %v384
    %475 = vmatprep.subr.mxu0 0.0
    %476 = vmatpush1.msra.mxu0 %v383
    %477 = vmatprep.subr.mxu0 0.0
    %478 = vmatpush1.msra.mxu0 %v382
    %479 = vmatprep.subr.mxu0 0.0
    %480 = vmatpush1.msra.mxu0 %v381
    %481 = vmatprep.subr.mxu0 0.0
    %482 = vmatpush1.msra.mxu0 %v380
    %483 = vmatprep.subr.mxu0 0.0
    %484 = vmatpush2.msra.mxu0 %v411
    %485 = vmatprep.subr.mxu0 0.0
    %486 = vmatpush2.msra.mxu0 %v410
    %487 = vmatprep.subr.mxu0 0.0
    %488 = vmatpush2.msra.mxu0 %v409
    %489 = vmatprep.subr.mxu0 0.0
    %490 = vmatpush2.msra.mxu0 %v408
    %491 = vmatprep.subr.mxu0 0.0
    %492 = vmatpush2.msra.mxu0 %v407
    %493 = vmatprep.subr.mxu0 0.0
    %494 = vmatpush2.msra.mxu0 %v406
    %495 = vmatprep.subr.mxu0 0.0
    %496 = vmatpush2.msra.mxu0 %v405
    %497 = vmatprep.subr.mxu0 0.0
    %498 = vmatpush2.msra.mxu0 %v404
    %499 = vmatprep.subr.mxu0 0.0
    %500 = vmatpush2.msra.mxu0 %v403
    %501 = vmatprep.subr.mxu0 0.0
    %502 = vmatpush2.msra.mxu0 %v402
    %503 = vmatprep.subr.mxu0 0.0
    %504 = vmatpush2.msra.mxu0 %v401
    %505 = vmatprep.subr.mxu0 0.0
    %506 = vmatpush2.msra.mxu0 %v400
    %507 = vmatprep.subr.mxu0 0.0
    %508 = vmatpush2.msra.mxu0 %v399
    %509 = vmatprep.subr.mxu0 0.0
    %510 = vmatpush2.msra.mxu0 %v398
    %511 = vmatprep.subr.mxu0 0.0
    %512 = vmatpush2.msra.mxu0 %v397
    %513 = vmatprep.subr.mxu0 0.0
    %514 = vmatpush2.msra.mxu0 %v396
    %515 = vmatprep.mubr.f32.mxu0 %v373
    %516 = vmatmul.mubr.f32.gmra.mxu0 %v372
    %v517 = vpop.f32.mrf.mxu0
    %v518 = vadd.f32 %v449, %v517
    %v519 = vpop.f32.mrf.mxu0
    %520 = vmatprep.mubr.f32.mxu0 %v377
    %521 = vmatmul.mubr.f32.gmra.mxu0 %v376
    %v522 = vpop.f32.mrf.mxu0
    %v523 = vadd.f32 %v449, %v522
    %v524 = vpop.f32.mrf.mxu0
    %525 = vdwg.mxu0
    %526 = vmatprep.subr.mxu0 0.0
    %527 = vmatpush1.msra.mxu0 %v427
    %528 = vmatprep.subr.mxu0 0.0
    %529 = vmatpush1.msra.mxu0 %v426
    %530 = vmatprep.subr.mxu0 0.0
    %531 = vmatpush1.msra.mxu0 %v425
    %532 = vmatprep.subr.mxu0 0.0
    %533 = vmatpush1.msra.mxu0 %v424
    %534 = vmatprep.subr.mxu0 0.0
    %535 = vmatpush1.msra.mxu0 %v423
    %536 = vmatprep.subr.mxu0 0.0
    %537 = vmatpush1.msra.mxu0 %v422
    %538 = vmatprep.subr.mxu0 0.0
    %539 = vmatpush1.msra.mxu0 %v421
    %540 = vmatprep.subr.mxu0 0.0
    %541 = vmatpush1.msra.mxu0 %v420
    %542 = vmatprep.subr.mxu0 0.0
    %543 = vmatpush1.msra.mxu0 %v419
    %544 = vmatprep.subr.mxu0 0.0
    %545 = vmatpush1.msra.mxu0 %v418
    %546 = vmatprep.subr.mxu0 0.0
    %547 = vmatpush1.msra.mxu0 %v417
    %548 = vmatprep.subr.mxu0 0.0
    %549 = vmatpush1.msra.mxu0 %v416
    %550 = vmatprep.subr.mxu0 0.0
    %551 = vmatpush1.msra.mxu0 %v415
    %552 = vmatprep.subr.mxu0 0.0
    %553 = vmatpush1.msra.mxu0 %v414
    %554 = vmatprep.subr.mxu0 0.0
    %555 = vmatpush1.msra.mxu0 %v413
    %556 = vmatprep.subr.mxu0 0.0
    %557 = vmatpush1.msra.mxu0 %v412
    %558 = vmatprep.subr.mxu0 0.0
    %559 = vmatpush2.msra.mxu0 %v443
    %560 = vmatprep.subr.mxu0 0.0
    %561 = vmatpush2.msra.mxu0 %v442
    %562 = vmatprep.subr.mxu0 0.0
    %563 = vmatpush2.msra.mxu0 %v441
    %564 = vmatprep.subr.mxu0 0.0
    %565 = vmatpush2.msra.mxu0 %v440
    %566 = vmatprep.subr.mxu0 0.0
    %567 = vmatpush2.msra.mxu0 %v439
    %568 = vmatprep.subr.mxu0 0.0
    %569 = vmatpush2.msra.mxu0 %v438
    %570 = vmatprep.subr.mxu0 0.0
    %571 = vmatpush2.msra.mxu0 %v437
    %572 = vmatprep.subr.mxu0 0.0
    %573 = vmatpush2.msra.mxu0 %v436
    %574 = vmatprep.subr.mxu0 0.0
    %575 = vmatpush2.msra.mxu0 %v435
    %576 = vmatprep.subr.mxu0 0.0
    %577 = vmatpush2.msra.mxu0 %v434
    %578 = vmatprep.subr.mxu0 0.0
    %579 = vmatpush2.msra.mxu0 %v433
    %580 = vmatprep.subr.mxu0 0.0
    %581 = vmatpush2.msra.mxu0 %v432
    %582 = vmatprep.subr.mxu0 0.0
    %583 = vmatpush2.msra.mxu0 %v431
    %584 = vmatprep.subr.mxu0 0.0
    %585 = vmatpush2.msra.mxu0 %v430
    %586 = vmatprep.subr.mxu0 0.0
    %587 = vmatpush2.msra.mxu0 %v429
    %588 = vmatprep.subr.mxu0 0.0
    %589 = vmatpush2.msra.mxu0 %v428
    %590 = vmatprep.mubr.f32.mxu0 %v375
    %591 = vmatmul.mubr.f32.gmra.mxu0 %v374
    %v592 = vpop.f32.mrf.mxu0
    %v593 = vadd.f32 %v518, %v592
    %v594 = vpop.f32.mrf.mxu0
    %595 = vmatprep.mubr.f32.mxu0 %v379
    %596 = vmatmul.mubr.f32.gmra.mxu0 %v378
    %v597 = vpop.f32.mrf.mxu0
    %v598 = vadd.f32 %v523, %v597
    %v599 = vpop.f32.mrf.mxu0
    %600 = vdwg.mxu0
    %601 = vst [vmem:[#allocation10] sm:$0xff] %v593
    %602 = vst [vmem:[#allocation10 + $0x8] sm:$0xff] %v598
    // Predicated region
    $region38: #{tpu_custom_call.1} parent=1 // pred_check
      _
    $region39: #{tpu_custom_call.1} parent=1 // pred_check_branch
      %604 = sbr.rel (0) target = $region41
    $region40: #{tpu_custom_call.1} parent=1 // pred_region
      %s606 = ssub.s32 256, 256
      %607 = vsyncadd [#allocation4], %s606
      %s608 = sshll.u32 [#allocation10], 4
      %s609 = int_to_ptr.vmem [resolvable:$true] %s608
      %614 = dma.vmem_to_hbm [thread:$0]  %s609, 256, %s5, [#allocation4], 128, 128, 8
    $region41: #{tpu_custom_call.1} parent=1 // pred_fallthru
      _
    // Predicated region
    $region42: #{tpu_custom_call.1} parent=1 // pred_check
      _
    $region43: #{tpu_custom_call.1} parent=1 // pred_check_branch
      %616 = sbr.rel (0) target = $region45
    $region44: #{tpu_custom_call.1} parent=1 // pred_region
      %617 = dma.done [#allocation4], 256
    $region45: #{tpu_custom_call.1} parent=1 // pred_fallthru
      _
    %618 = vsyncpa [#allocation3], 1
    %619 = vsyncpa [#allocation6], 1
    %620 = vsyncpa [#allocation9], 1
    %621 = vsyncpa [#allocation4], 1

// kernel: tpu_custom_call.1
$region0: #{tpu_custom_call.1}
  #allocation0 [shape = 'u32[]', space=smem, size = 0x4, offset = 0x4, fixed_abs, tag = 'smem constant byte address 0x4 - core index']
  #allocation1 [shape = 'u32[144,128]{1,0:T(1,128)}', space=vmem, size = 0x12000, scoped, tag = 'internal scratch']
  %s0 = inlined_call_operand.hbm [shape: f32[16,128], index: 0, kind: input, shape index: {}]
  %s1 = inlined_call_operand.hbm [shape: f32[128,512], index: 1, kind: input, shape index: {}]
  %s2 = inlined_call_operand.hbm [shape: f32[1,512], index: 2, kind: input, shape index: {}]
  %s3 = inlined_call_operand.hbm [shape: f32[512,128], index: 3, kind: input, shape index: {}]
  %s4 = inlined_call_operand.vmem [shape: f32[1,128], index: 4, kind: input, shape index: {}]
  %s5 = inlined_call_operand.hbm [shape: f32[16,128], index: 5, kind: output, shape index: {}]
  %s6 = sld [smem:[#allocation0]]
  $region46: #{tpu_custom_call.1} parent=0
    _
  %s8 = ssub.s32 1, %s6
  %s9 = scalar_select 0, %s8, %s6
  $region1: #{tpu_custom_call.1} parent=0
    #allocation2 [shape = 'u8[8192]{0}', space=vmem, size = 0x2000, scoped, tag = 'input window, operand 0, single buffered']
    #allocation3 [shape = 's32[1]{0}', space=sflag, size = 0x4, scoped, tag = 'scoped memory for tpu_custom_call.1']
    #allocation4 [shape = 's32[1]{0}', space=sflag, size = 0x4, scoped, tag = 'scoped memory for tpu_custom_call.1']
    #allocation5 [shape = 'u8[262144]{0}', space=vmem, size = 0x40000, scoped, tag = 'input window, operand 1, single buffered']
    #allocation6 [shape = 's32[1]{0}', space=sflag, size = 0x4, scoped, tag = 'scoped memory for tpu_custom_call.1']
    #allocation7 [shape = 'u8[2048]{0}', space=vmem, size = 0x800, scoped, tag = 'input window, operand 2, single buffered']
    #allocation8 [shape = 'u8[262144]{0}', space=vmem, size = 0x40000, scoped, tag = 'input window, operand 3, single buffered']
    #allocation9 [shape = 's32[1]{0}', space=sflag, size = 0x4, scoped, tag = 'scoped memory for tpu_custom_call.1']
    #allocation10 [shape = 'u8[8192]{0}', space=vmem, size = 0x2000, scoped, tag = 'output window, operand 0, single buffered']
    %10 = vsyncpa [#allocation3], 0
    %11 = vsyncpa [#allocation6], 0
    %12 = vsyncpa [#allocation9], 0
    %13 = vsyncpa [#allocation4], 0
    // Predicated region
    $region2: #{tpu_custom_call.1} parent=1 // pred_check
      _
    $region3: #{tpu_custom_call.1} parent=1 // pred_check_branch
      %15 = sbr.rel (0) target = $region5
    $region4: #{tpu_custom_call.1} parent=1 // pred_region
      %s17 = ssub.s32 256, 256
      %18 = vsyncadd [#allocation3], %s17
      %s19 = sshll.u32 [#allocation2], 4
      %s20 = int_to_ptr.vmem [resolvable:$true] %s19
      %25 = dma.hbm_to_vmem [thread:$0]  %s0, 256, %s20, [#allocation3], 128, 128, 8
    $region5: #{tpu_custom_call.1} parent=1 // pred_fallthru
      _
    // Predicated region
    $region6: #{tpu_custom_call.1} parent=1 // pred_check
      _
    $region7: #{tpu_custom_call.1} parent=1 // pred_check_branch
      %27 = sbr.rel (0) target = $region9
    $region8: #{tpu_custom_call.1} parent=1 // pred_region
      %s29 = ssub.s32 8192, 8192
      %30 = vsyncadd [#allocation6], %s29
      %s31 = sshll.u32 [#allocation5], 4
      %s32 = int_to_ptr.vmem [resolvable:$true] %s31
      %37 = dma.hbm_to_vmem [thread:$0]  %s1, 8192, %s32, [#allocation6], 512, 512, 32
    $region9: #{tpu_custom_call.1} parent=1 // pred_fallthru
      _
    // Predicated region
    $region10: #{tpu_custom_call.1} parent=1 // pred_check
      _
    $region11: #{tpu_custom_call.1} parent=1 // pred_check_branch
      %39 = sbr.rel (0) target = $region13
    $region12: #{tpu_custom_call.1} parent=1 // pred_region
      %s41 = ssub.s32 64, 64
      %42 = vsyncadd [#allocation6], %s41
      %s44 = sshll.u32 [#allocation7], 4
      %s45 = int_to_ptr.vmem [resolvable:$true] %s44
      %47 = dma.hbm_to_vmem [thread:$0]  %s2, 64, %s45, [#allocation6]
    $region13: #{tpu_custom_call.1} parent=1 // pred_fallthru
      _
    // Predicated region
    $region14: #{tpu_custom_call.1} parent=1 // pred_check
      _
    $region15: #{tpu_custom_call.1} parent=1 // pred_check_branch
      %49 = sbr.rel (0) target = $region17
    $region16: #{tpu_custom_call.1} parent=1 // pred_region
      %s51 = ssub.s32 8192, 8192
      %52 = vsyncadd [#allocation9], %s51
      %s53 = sshll.u32 [#allocation8], 4
      %s54 = int_to_ptr.vmem [resolvable:$true] %s53
      %59 = dma.hbm_to_vmem [thread:$0]  %s3, 8192, %s54, [#allocation9], 128, 128, 8
    $region17: #{tpu_custom_call.1} parent=1 // pred_fallthru
      _
    // Predicated region
    $region18: #{tpu_custom_call.1} parent=1 // pred_check
      _
    $region19: #{tpu_custom_call.1} parent=1 // pred_check_branch
      %61 = sbr.rel (0) target = $region21
    $region20: #{tpu_custom_call.1} parent=1 // pred_region
      _
    $region21: #{tpu_custom_call.1} parent=1 // pred_fallthru
      _
    // Predicated region
    $region22: #{tpu_custom_call.1} parent=1 // pred_check
      _
    $region23: #{tpu_custom_call.1} parent=1 // pred_check_branch
      %63 = sbr.rel (0) target = $region25
    $region24: #{tpu_custom_call.1} parent=1 // pred_region
      %64 = dma.done [#allocation3], 256
    $region25: #{tpu_custom_call.1} parent=1 // pred_fallthru
      _
    // Predicated region
    $region26: #{tpu_custom_call.1} parent=1 // pred_check
      _
    $region27: #{tpu_custom_call.1} parent=1 // pred_check_branch
      %66 = sbr.rel (0) target = $region29
    $region28: #{tpu_custom_call.1} parent=1 // pred_region
      %67 = dma.done [#allocation6], 8192
    $region29: #{tpu_custom_call.1} parent=1 // pred_fallthru
      _
    // Predicated region
    $region30: #{tpu_custom_call.1} parent=1 // pred_check
      _
    $region31: #{tpu_custom_call.1} parent=1 // pred_check_branch
      %69 = sbr.rel (0) target = $region33
    $region32: #{tpu_custom_call.1} parent=1 // pred_region
      %70 = dma.done [#allocation6], 64
    $region33: #{tpu_custom_call.1} parent=1 // pred_fallthru
      _
    // Predicated region
    $region34: #{tpu_custom_call.1} parent=1 // pred_check
      _
    $region35: #{tpu_custom_call.1} parent=1 // pred_check_branch
      %72 = sbr.rel (0) target = $region37
    $region36: #{tpu_custom_call.1} parent=1 // pred_region
      %73 = dma.done [#allocation9], 8192
    $region37: #{tpu_custom_call.1} parent=1 // pred_fallthru
      _
    %v74 = vld [vmem:[#allocation2] sm:$0xff]
    %v75 = vld [vmem:[#allocation2 + $0x8] sm:$0xff]
    %v76 = vld [vmem:[#allocation5] sm:$0xff]
    %v77 = vld [vmem:[#allocation5 + $0x8] sm:$0xff]
    %v78 = vld [vmem:[#allocation5 + $0x10] sm:$0xff]
    %v79 = vld [vmem:[#allocation5 + $0x18] sm:$0xff]
    %v80 = vld [vmem:[#allocation5 + $0x20] sm:$0xff]
    %v81 = vld [vmem:[#allocation5 + $0x28] sm:$0xff]
    %v82 = vld [vmem:[#allocation5 + $0x30] sm:$0xff]
    %v83 = vld [vmem:[#allocation5 + $0x38] sm:$0xff]
    %v84 = vld [vmem:[#allocation5 + $0x40] sm:$0xff]
    %v85 = vld [vmem:[#allocation5 + $0x48] sm:$0xff]
    %v86 = vld [vmem:[#allocation5 + $0x50] sm:$0xff]
    %v87 = vld [vmem:[#allocation5 + $0x58] sm:$0xff]
    %v88 = vld [vmem:[#allocation5 + $0x60] sm:$0xff]
    %v89 = vld [vmem:[#allocation5 + $0x68] sm:$0xff]
    %v90 = vld [vmem:[#allocation5 + $0x70] sm:$0xff]
    %v91 = vld [vmem:[#allocation5 + $0x78] sm:$0xff]
    %v92 = vld [vmem:[#allocation5 + $0x80] sm:$0xff]
    %v93 = vld [vmem:[#allocation5 + $0x88] sm:$0xff]
    %v94 = vld [vmem:[#allocation5 + $0x90] sm:$0xff]
    %v95 = vld [vmem:[#allocation5 + $0x98] sm:$0xff]
    %v96 = vld [vmem:[#allocation5 + $0xa0] sm:$0xff]
    %v97 = vld [vmem:[#allocation5 + $0xa8] sm:$0xff]
    %v98 = vld [vmem:[#allocation5 + $0xb0] sm:$0xff]
    %v99 = vld [vmem:[#allocation5 + $0xb8] sm:$0xff]
    %v100 = vld [vmem:[#allocation5 + $0xc0] sm:$0xff]
    %v101 = vld [vmem:[#allocation5 + $0xc8] sm:$0xff]
    %v102 = vld [vmem:[#allocation5 + $0xd0] sm:$0xff]
    %v103 = vld [vmem:[#allocation5 + $0xd8] sm:$0xff]
    %v104 = vld [vmem:[#allocation5 + $0xe0] sm:$0xff]
    %v105 = vld [vmem:[#allocation5 + $0xe8] sm:$0xff]
    %v106 = vld [vmem:[#allocation5 + $0xf0] sm:$0xff]
    %v107 = vld [vmem:[#allocation5 + $0xf8] sm:$0xff]
    %v108 = vld [vmem:[#allocation5 + $0x100] sm:$0xff]
    %v109 = vld [vmem:[#allocation5 + $0x108] sm:$0xff]
    %v110 = vld [vmem:[#allocation5 + $0x110] sm:$0xff]
    %v111 = vld [vmem:[#allocation5 + $0x118] sm:$0xff]
    %v112 = vld [vmem:[#allocation5 + $0x120] sm:$0xff]
    %v113 = vld [vmem:[#allocation5 + $0x128] sm:$0xff]
    %v114 = vld [vmem:[#allocation5 + $0x130] sm:$0xff]
    %v115 = vld [vmem:[#allocation5 + $0x138] sm:$0xff]
    %v116 = vld [vmem:[#allocation5 + $0x140] sm:$0xff]
    %v117 = vld [vmem:[#allocation5 + $0x148] sm:$0xff]
    %v118 = vld [vmem:[#allocation5 + $0x150] sm:$0xff]
    %v119 = vld [vmem:[#allocation5 + $0x158] sm:$0xff]
    %v120 = vld [vmem:[#allocation5 + $0x160] sm:$0xff]
    %v121 = vld [vmem:[#allocation5 + $0x168] sm:$0xff]
    %v122 = vld [vmem:[#allocation5 + $0x170] sm:$0xff]
    %v123 = vld [vmem:[#allocation5 + $0x178] sm:$0xff]
    %v124 = vld [vmem:[#allocation5 + $0x180] sm:$0xff]
    %v125 = vld [vmem:[#allocation5 + $0x188] sm:$0xff]
    %v126 = vld [vmem:[#allocation5 + $0x190] sm:$0xff]
    %v127 = vld [vmem:[#allocation5 + $0x198] sm:$0xff]
    %v128 = vld [vmem:[#allocation5 + $0x1a0] sm:$0xff]
    %v129 = vld [vmem:[#allocation5 + $0x1a8] sm:$0xff]
    %v130 = vld [vmem:[#allocation5 + $0x1b0] sm:$0xff]
    %v131 = vld [vmem:[#allocation5 + $0x1b8] sm:$0xff]
    %v132 = vld [vmem:[#allocation5 + $0x1c0] sm:$0xff]
    %v133 = vld [vmem:[#allocation5 + $0x1c8] sm:$0xff]
    %v134 = vld [vmem:[#allocation5 + $0x1d0] sm:$0xff]
    %v135 = vld [vmem:[#allocation5 + $0x1d8] sm:$0xff]
    %v136 = vld [vmem:[#allocation5 + $0x1e0] sm:$0xff]
    %v137 = vld [vmem:[#allocation5 + $0x1e8] sm:$0xff]
    %v138 = vld [vmem:[#allocation5 + $0x1f0] sm:$0xff]
    %v139 = vld [vmem:[#allocation5 + $0x1f8] sm:$0xff]
    %v140 = vld [vmem:[#allocation7] sm:$0xf]
    %v142 = vlaneseq
    %v143 = vshrl.u32 %v142, 7
    %v144 = vsub.s32 0, %v143
    %v145 = vrot.slane %v140, %v144
    %v146 = vlaneseq
    %v147 = vshrl.u32 %v146, 7
    %v148 = vsub.s32 1, %v147
    %v149 = vrot.slane %v140, %v148
    %v150 = vlaneseq
    %v151 = vshrl.u32 %v150, 7
    %v152 = vsub.s32 2, %v151
    %v153 = vrot.slane %v140, %v152
    %v154 = vlaneseq
    %v155 = vshrl.u32 %v154, 7
    %v156 = vsub.s32 3, %v155
    %v157 = vrot.slane %v140, %v156
    %162 = vmatprep.subr.mxu0 %v137
    %163 = vmatpush1.msra.mxu0 %v136
    %164 = vmatprep.subr.mxu0 %v133
    %165 = vmatpush1.msra.mxu0 %v132
    %166 = vmatprep.subr.mxu0 %v129
    %167 = vmatpush1.msra.mxu0 %v128
    %168 = vmatprep.subr.mxu0 %v125
    %169 = vmatpush1.msra.mxu0 %v124
    %170 = vmatprep.subr.mxu0 %v121
    %171 = vmatpush1.msra.mxu0 %v120
    %172 = vmatprep.subr.mxu0 %v117
    %173 = vmatpush1.msra.mxu0 %v116
    %174 = vmatprep.subr.mxu0 %v113
    %175 = vmatpush1.msra.mxu0 %v112
    %176 = vmatprep.subr.mxu0 %v109
    %177 = vmatpush1.msra.mxu0 %v108
    %178 = vmatprep.subr.mxu0 %v105
    %179 = vmatpush1.msra.mxu0 %v104
    %180 = vmatprep.subr.mxu0 %v101
    %181 = vmatpush1.msra.mxu0 %v100
    %182 = vmatprep.subr.mxu0 %v97
    %183 = vmatpush1.msra.mxu0 %v96
    %184 = vmatprep.subr.mxu0 %v93
    %185 = vmatpush1.msra.mxu0 %v92
    %186 = vmatprep.subr.mxu0 %v89
    %187 = vmatpush1.msra.mxu0 %v88
    %188 = vmatprep.subr.mxu0 %v85
    %189 = vmatpush1.msra.mxu0 %v84
    %190 = vmatprep.subr.mxu0 %v81
    %191 = vmatpush1.msra.mxu0 %v80
    %192 = vmatprep.subr.mxu0 %v77
    %193 = vmatpush1.msra.mxu0 %v76
    %194 = vmatprep.subr.mxu0 0.0
    %195 = vmatpush2.msra.mxu0 0.0
    %196 = vmatprep.subr.mxu0 0.0
    %197 = vmatpush2.msra.mxu0 0.0
    %198 = vmatprep.subr.mxu0 0.0
    %199 = vmatpush2.msra.mxu0 0.0
    %200 = vmatprep.subr.mxu0 0.0
    %201 = vmatpush2.msra.mxu0 0.0
    %202 = vmatprep.subr.mxu0 0.0
    %203 = vmatpush2.msra.mxu0 0.0
    %204 = vmatprep.subr.mxu0 0.0
    %205 = vmatpush2.msra.mxu0 0.0
    %206 = vmatprep.subr.mxu0 0.0
    %207 = vmatpush2.msra.mxu0 0.0
    %208 = vmatprep.subr.mxu0 0.0
    %209 = vmatpush2.msra.mxu0 0.0
    %210 = vmatprep.subr.mxu0 0.0
    %211 = vmatpush2.msra.mxu0 0.0
    %212 = vmatprep.subr.mxu0 0.0
    %213 = vmatpush2.msra.mxu0 0.0
    %214 = vmatprep.subr.mxu0 0.0
    %215 = vmatpush2.msra.mxu0 0.0
    %216 = vmatprep.subr.mxu0 0.0
    %217 = vmatpush2.msra.mxu0 0.0
    %218 = vmatprep.subr.mxu0 0.0
    %219 = vmatpush2.msra.mxu0 0.0
    %220 = vmatprep.subr.mxu0 0.0
    %221 = vmatpush2.msra.mxu0 0.0
    %222 = vmatprep.subr.mxu0 0.0
    %223 = vmatpush2.msra.mxu0 0.0
    %224 = vmatprep.subr.mxu0 0.0
    %225 = vmatpush2.msra.mxu0 0.0
    %226 = vmatprep.mubr.f32.mxu0 0.0
    %227 = vmatmul.mubr.f32.gmra.mxu0 %v74
    %v228 = vpop.f32.mrf.mxu0
    %v229 = vadd.f32 %v145, %v228
    %v230 = vpop.f32.mrf.mxu0
    %v231 = vadd.f32 %v149, %v230
    %232 = vmatprep.mubr.f32.mxu0 0.0
    %233 = vmatmul.mubr.f32.gmra.mxu0 %v75
    %v234 = vpop.f32.mrf.mxu0
    %v235 = vadd.f32 %v145, %v234
    %v236 = vpop.f32.mrf.mxu0
    %v237 = vadd.f32 %v149, %v236
    %238 = vdwg.mxu0
    %239 = vmatprep.subr.mxu0 %v139
    %240 = vmatpush1.msra.mxu0 %v138
    %241 = vmatprep.subr.mxu0 %v135
    %242 = vmatpush1.msra.mxu0 %v134
    %243 = vmatprep.subr.mxu0 %v131
    %244 = vmatpush1.msra.mxu0 %v130
    %245 = vmatprep.subr.mxu0 %v127
    %246 = vmatpush1.msra.mxu0 %v126
    %247 = vmatprep.subr.mxu0 %v123
    %248 = vmatpush1.msra.mxu0 %v122
    %249 = vmatprep.subr.mxu0 %v119
    %250 = vmatpush1.msra.mxu0 %v118
    %251 = vmatprep.subr.mxu0 %v115
    %252 = vmatpush1.msra.mxu0 %v114
    %253 = vmatprep.subr.mxu0 %v111
    %254 = vmatpush1.msra.mxu0 %v110
    %255 = vmatprep.subr.mxu0 %v107
    %256 = vmatpush1.msra.mxu0 %v106
    %257 = vmatprep.subr.mxu0 %v103
    %258 = vmatpush1.msra.mxu0 %v102
    %259 = vmatprep.subr.mxu0 %v99
    %260 = vmatpush1.msra.mxu0 %v98
    %261 = vmatprep.subr.mxu0 %v95
    %262 = vmatpush1.msra.mxu0 %v94
    %263 = vmatprep.subr.mxu0 %v91
    %264 = vmatpush1.msra.mxu0 %v90
    %265 = vmatprep.subr.mxu0 %v87
    %266 = vmatpush1.msra.mxu0 %v86
    %267 = vmatprep.subr.mxu0 %v83
    %268 = vmatpush1.msra.mxu0 %v82
    %269 = vmatprep.subr.mxu0 %v79
    %270 = vmatpush1.msra.mxu0 %v78
    %271 = vmatprep.subr.mxu0 0.0
    %272 = vmatpush2.msra.mxu0 0.0
    %273 = vmatprep.subr.mxu0 0.0
    %274 = vmatpush2.msra.mxu0 0.0
    %275 = vmatprep.subr.mxu0 0.0
    %276 = vmatpush2.msra.mxu0 0.0
    %277 = vmatprep.subr.mxu0 0.0
    %278 = vmatpush2.msra.mxu0 0.0
    %279 = vmatprep.subr.mxu0 0.0
    %280 = vmatpush2.msra.mxu0 0.0
    %281 = vmatprep.subr.mxu0 0.0
    %282 = vmatpush2.msra.mxu0 0.0
    %283 = vmatprep.subr.mxu0 0.0
    %284 = vmatpush2.msra.mxu0 0.0
    %285 = vmatprep.subr.mxu0 0.0
    %286 = vmatpush2.msra.mxu0 0.0
    %287 = vmatprep.subr.mxu0 0.0
    %288 = vmatpush2.msra.mxu0 0.0
    %289 = vmatprep.subr.mxu0 0.0
    %290 = vmatpush2.msra.mxu0 0.0
    %291 = vmatprep.subr.mxu0 0.0
    %292 = vmatpush2.msra.mxu0 0.0
    %293 = vmatprep.subr.mxu0 0.0
    %294 = vmatpush2.msra.mxu0 0.0
    %295 = vmatprep.subr.mxu0 0.0
    %296 = vmatpush2.msra.mxu0 0.0
    %297 = vmatprep.subr.mxu0 0.0
    %298 = vmatpush2.msra.mxu0 0.0
    %299 = vmatprep.subr.mxu0 0.0
    %300 = vmatpush2.msra.mxu0 0.0
    %301 = vmatprep.subr.mxu0 0.0
    %302 = vmatpush2.msra.mxu0 0.0
    %303 = vmatprep.mubr.f32.mxu0 0.0
    %304 = vmatmul.mubr.f32.gmra.mxu0 %v74
    %v305 = vpop.f32.mrf.mxu0
    %v306 = vadd.f32 %v153, %v305
    %v307 = vpop.f32.mrf.mxu0
    %v308 = vadd.f32 %v157, %v307
    %309 = vmatprep.mubr.f32.mxu0 0.0
    %310 = vmatmul.mubr.f32.gmra.mxu0 %v75
    %v311 = vpop.f32.mrf.mxu0
    %v312 = vadd.f32 %v153, %v311
    %v313 = vpop.f32.mrf.mxu0
    %v314 = vadd.f32 %v157, %v313
    %315 = vdwg.mxu0
    %v316 = vmul.f32 %v229, 1.702
    %v317 = vmul.f32 %v231, 1.702
    %v318 = vmul.f32 %v306, 1.702
    %v319 = vmul.f32 %v308, 1.702
    %v320 = vmul.f32 %v235, 1.702
    %v321 = vmul.f32 %v237, 1.702
    %v322 = vmul.f32 %v312, 1.702
    %v323 = vmul.f32 %v314, 1.702
    %v324 = vxor.u32 %v316, 2147483648
    %v325 = vxor.u32 %v317, 2147483648
    %v326 = vxor.u32 %v318, 2147483648
    %v327 = vxor.u32 %v319, 2147483648
    %v328 = vxor.u32 %v320, 2147483648
    %v329 = vxor.u32 %v321, 2147483648
    %v330 = vxor.u32 %v322, 2147483648
    %v331 = vxor.u32 %v323, 2147483648
    %v332 = vmul.f32 %v324, 1.442695
    %v333 = vpow.pop %v332
    %v334 = vmul.f32 %v325, 1.442695
    %v335 = vpow.pop %v334
    %v336 = vmul.f32 %v326, 1.442695
    %v337 = vpow.pop %v336
    %v338 = vmul.f32 %v327, 1.442695
    %v339 = vpow.pop %v338
    %v340 = vmul.f32 %v328, 1.442695
    %v341 = vpow.pop %v340
    %v342 = vmul.f32 %v329, 1.442695
    %v343 = vpow.pop %v342
    %v344 = vmul.f32 %v330, 1.442695
    %v345 = vpow.pop %v344
    %v346 = vmul.f32 %v331, 1.442695
    %v347 = vpow.pop %v346
    %v348 = vadd.f32 %v333, 1.0
    %v349 = vadd.f32 %v335, 1.0
    %v350 = vadd.f32 %v337, 1.0
    %v351 = vadd.f32 %v339, 1.0
    %v352 = vadd.f32 %v341, 1.0
    %v353 = vadd.f32 %v343, 1.0
    %v354 = vadd.f32 %v345, 1.0
    %v355 = vadd.f32 %v347, 1.0
    %v356 = vrcp.pop %v348
    %v357 = vmul.f32 1.0, %v356
    %v358 = vrcp.pop %v349
    %v359 = vmul.f32 1.0, %v358
    %v360 = vrcp.pop %v350
    %v361 = vmul.f32 1.0, %v360
    %v362 = vrcp.pop %v351
    %v363 = vmul.f32 1.0, %v362
    %v364 = vrcp.pop %v352
    %v365 = vmul.f32 1.0, %v364
    %v366 = vrcp.pop %v353
    %v367 = vmul.f32 1.0, %v366
    %v368 = vrcp.pop %v354
    %v369 = vmul.f32 1.0, %v368
    %v370 = vrcp.pop %v355
    %v371 = vmul.f32 1.0, %v370
    %v372 = vmul.f32 %v229, %v357
    %v373 = vmul.f32 %v231, %v359
    %v374 = vmul.f32 %v306, %v361
    %v375 = vmul.f32 %v308, %v363
    %v376 = vmul.f32 %v235, %v365
    %v377 = vmul.f32 %v237, %v367
    %v378 = vmul.f32 %v312, %v369
    %v379 = vmul.f32 %v314, %v371
    %v380 = vld [vmem:[#allocation8] sm:$0xff]
    %v381 = vld [vmem:[#allocation8 + $0x8] sm:$0xff]
    %v382 = vld [vmem:[#allocation8 + $0x10] sm:$0xff]
    %v383 = vld [vmem:[#allocation8 + $0x18] sm:$0xff]
    %v384 = vld [vmem:[#allocation8 + $0x20] sm:$0xff]
    %v385 = vld [vmem:[#allocation8 + $0x28] sm:$0xff]
    %v386 = vld [vmem:[#allocation8 + $0x30] sm:$0xff]
    %v387 = vld [vmem:[#allocation8 + $0x38] sm:$0xff]
    %v388 = vld [vmem:[#allocation8 + $0x40] sm:$0xff]
    %v389 = vld [vmem:[#allocation8 + $0x48] sm:$0xff]
    %v390 = vld [vmem:[#allocation8 + $0x50] sm:$0xff]
    %v391 = vld [vmem:[#allocation8 + $0x58] sm:$0xff]
    %v392 = vld [vmem:[#allocation8 + $0x60] sm:$0xff]
    %v393 = vld [vmem:[#allocation8 + $0x68] sm:$0xff]
    %v394 = vld [vmem:[#allocation8 + $0x70] sm:$0xff]
    %v395 = vld [vmem:[#allocation8 + $0x78] sm:$0xff]
    %v396 = vld [vmem:[#allocation8 + $0x80] sm:$0xff]
    %v397 = vld [vmem:[#allocation8 + $0x88] sm:$0xff]
    %v398 = vld [vmem:[#allocation8 + $0x90] sm:$0xff]
    %v399 = vld [vmem:[#allocation8 + $0x98] sm:$0xff]
    %v400 = vld [vmem:[#allocation8 + $0xa0] sm:$0xff]
    %v401 = vld [vmem:[#allocation8 + $0xa8] sm:$0xff]
    %v402 = vld [vmem:[#allocation8 + $0xb0] sm:$0xff]
    %v403 = vld [vmem:[#allocation8 + $0xb8] sm:$0xff]
    %v404 = vld [vmem:[#allocation8 + $0xc0] sm:$0xff]
    %v405 = vld [vmem:[#allocation8 + $0xc8] sm:$0xff]
    %v406 = vld [vmem:[#allocation8 + $0xd0] sm:$0xff]
    %v407 = vld [vmem:[#allocation8 + $0xd8] sm:$0xff]
    %v408 = vld [vmem:[#allocation8 + $0xe0] sm:$0xff]
    %v409 = vld [vmem:[#allocation8 + $0xe8] sm:$0xff]
    %v410 = vld [vmem:[#allocation8 + $0xf0] sm:$0xff]
    %v411 = vld [vmem:[#allocation8 + $0xf8] sm:$0xff]
    %v412 = vld [vmem:[#allocation8 + $0x100] sm:$0xff]
    %v413 = vld [vmem:[#allocation8 + $0x108] sm:$0xff]
    %v414 = vld [vmem:[#allocation8 + $0x110] sm:$0xff]
    %v415 = vld [vmem:[#allocation8 + $0x118] sm:$0xff]
    %v416 = vld [vmem:[#allocation8 + $0x120] sm:$0xff]
    %v417 = vld [vmem:[#allocation8 + $0x128] sm:$0xff]
    %v418 = vld [vmem:[#allocation8 + $0x130] sm:$0xff]
    %v419 = vld [vmem:[#allocation8 + $0x138] sm:$0xff]
    %v420 = vld [vmem:[#allocation8 + $0x140] sm:$0xff]
    %v421 = vld [vmem:[#allocation8 + $0x148] sm:$0xff]
    %v422 = vld [vmem:[#allocation8 + $0x150] sm:$0xff]
    %v423 = vld [vmem:[#allocation8 + $0x158] sm:$0xff]
    %v424 = vld [vmem:[#allocation8 + $0x160] sm:$0xff]
    %v425 = vld [vmem:[#allocation8 + $0x168] sm:$0xff]
    %v426 = vld [vmem:[#allocation8 + $0x170] sm:$0xff]
    %v427 = vld [vmem:[#allocation8 + $0x178] sm:$0xff]
    %v428 = vld [vmem:[#allocation8 + $0x180] sm:$0xff]
    %v429 = vld [vmem:[#allocation8 + $0x188] sm:$0xff]
    %v430 = vld [vmem:[#allocation8 + $0x190] sm:$0xff]
    %v431 = vld [vmem:[#allocation8 + $0x198] sm:$0xff]
    %v432 = vld [vmem:[#allocation8 + $0x1a0] sm:$0xff]
    %v433 = vld [vmem:[#allocation8 + $0x1a8] sm:$0xff]
    %v434 = vld [vmem:[#allocation8 + $0x1b0] sm:$0xff]
    %v435 = vld [vmem:[#allocation8 + $0x1b8] sm:$0xff]
    %v436 = vld [vmem:[#allocation8 + $0x1c0] sm:$0xff]
    %v437 = vld [vmem:[#allocation8 + $0x1c8] sm:$0xff]
    %v438 = vld [vmem:[#allocation8 + $0x1d0] sm:$0xff]
    %v439 = vld [vmem:[#allocation8 + $0x1d8] sm:$0xff]
    %v440 = vld [vmem:[#allocation8 + $0x1e0] sm:$0xff]
    %v441 = vld [vmem:[#allocation8 + $0x1e8] sm:$0xff]
    %v442 = vld [vmem:[#allocation8 + $0x1f0] sm:$0xff]
    %v443 = vld [vmem:[#allocation8 + $0x1f8] sm:$0xff]
    %v444 = vld [vmem:[%s4] sm:$0x1]
    %v446 = vlaneseq
    %v447 = vshrl.u32 %v446, 7
    %v448 = vsub.s32 0, %v447
    %v449 = vrot.slane %v444, %v448
    %451 = vmatprep.subr.mxu0 0.0
    %452 = vmatpush1.msra.mxu0 %v395
    %453 = vmatprep.subr.mxu0 0.0
    %454 = vmatpush1.msra.mxu0 %v394
    %455 = vmatprep.subr.mxu0 0.0
    %456 = vmatpush1.msra.mxu0 %v393
    %457 = vmatprep.subr.mxu0 0.0
    %458 = vmatpush1.msra.mxu0 %v392
    %459 = vmatprep.subr.mxu0 0.0
    %460 = vmatpush1.msra.mxu0 %v391
    %461 = vmatprep.subr.mxu0 0.0
    %462 = vmatpush1.msra.mxu0 %v390
    %463 = vmatprep.subr.mxu0 0.0
    %464 = vmatpush1.msra.mxu0 %v389
    %465 = vmatprep.subr.mxu0 0.0
    %466 = vmatpush1.msra.mxu0 %v388
    %467 = vmatprep.subr.mxu0 0.0
    %468 = vmatpush1.msra.mxu0 %v387
    %469 = vmatprep.subr.mxu0 0.0
    %470 = vmatpush1.msra.mxu0 %v386
    %471 = vmatprep.subr.mxu0 0.0
    %472 = vmatpush1.msra.mxu0 %v385
    %473 = vmatprep.subr.mxu0 0.0
    %474 = vmatpush1.msra.mxu0 %v384
    %475 = vmatprep.subr.mxu0 0.0
    %476 = vmatpush1.msra.mxu0 %v383
    %477 = vmatprep.subr.mxu0 0.0
    %478 = vmatpush1.msra.mxu0 %v382
    %479 = vmatprep.subr.mxu0 0.0
    %480 = vmatpush1.msra.mxu0 %v381
    %481 = vmatprep.subr.mxu0 0.0
    %482 = vmatpush1.msra.mxu0 %v380
    %483 = vmatprep.subr.mxu0 0.0
    %484 = vmatpush2.msra.mxu0 %v411
    %485 = vmatprep.subr.mxu0 0.0
    %486 = vmatpush2.msra.mxu0 %v410
    %487 = vmatprep.subr.mxu0 0.0
    %488 = vmatpush2.msra.mxu0 %v409
    %489 = vmatprep.subr.mxu0 0.0
    %490 = vmatpush2.msra.mxu0 %v408
    %491 = vmatprep.subr.mxu0 0.0
    %492 = vmatpush2.msra.mxu0 %v407
    %493 = vmatprep.subr.mxu0 0.0
    %494 = vmatpush2.msra.mxu0 %v406
    %495 = vmatprep.subr.mxu0 0.0
    %496 = vmatpush2.msra.mxu0 %v405
    %497 = vmatprep.subr.mxu0 0.0
    %498 = vmatpush2.msra.mxu0 %v404
    %499 = vmatprep.subr.mxu0 0.0
    %500 = vmatpush2.msra.mxu0 %v403
    %501 = vmatprep.subr.mxu0 0.0
    %502 = vmatpush2.msra.mxu0 %v402
    %503 = vmatprep.subr.mxu0 0.0
    %504 = vmatpush2.msra.mxu0 %v401
    %505 = vmatprep.subr.mxu0 0.0
    %506 = vmatpush2.msra.mxu0 %v400
    %507 = vmatprep.subr.mxu0 0.0
    %508 = vmatpush2.msra.mxu0 %v399
    %509 = vmatprep.subr.mxu0 0.0
    %510 = vmatpush2.msra.mxu0 %v398
    %511 = vmatprep.subr.mxu0 0.0
    %512 = vmatpush2.msra.mxu0 %v397
    %513 = vmatprep.subr.mxu0 0.0
    %514 = vmatpush2.msra.mxu0 %v396
    %515 = vmatprep.mubr.f32.mxu0 %v373
    %516 = vmatmul.mubr.f32.gmra.mxu0 %v372
    %v517 = vpop.f32.mrf.mxu0
    %v518 = vadd.f32 %v449, %v517
    %v519 = vpop.f32.mrf.mxu0
    %520 = vmatprep.mubr.f32.mxu0 %v377
    %521 = vmatmul.mubr.f32.gmra.mxu0 %v376
    %v522 = vpop.f32.mrf.mxu0
    %v523 = vadd.f32 %v449, %v522
    %v524 = vpop.f32.mrf.mxu0
    %525 = vdwg.mxu0
    %526 = vmatprep.subr.mxu0 0.0
    %527 = vmatpush1.msra.mxu0 %v427
    %528 = vmatprep.subr.mxu0 0.0
    %529 = vmatpush1.msra.mxu0 %v426
    %530 = vmatprep.subr.mxu0 0.0
    %531 = vmatpush1.msra.mxu0 %v425
    %532 = vmatprep.subr.mxu0 0.0
    %533 = vmatpush1.msra.mxu0 %v424
    %534 = vmatprep.subr.mxu0 0.0
    %535 = vmatpush1.msra.mxu0 %v423
    %536 = vmatprep.subr.mxu0 0.0
    %537 = vmatpush1.msra.mxu0 %v422
    %538 = vmatprep.subr.mxu0 0.0
    %539 = vmatpush1.msra.mxu0 %v421
    %540 = vmatprep.subr.mxu0 0.0
    %541 = vmatpush1.msra.mxu0 %v420
    %542 = vmatprep.subr.mxu0 0.0
    %543 = vmatpush1.msra.mxu0 %v419
    %544 = vmatprep.subr.mxu0 0.0
    %545 = vmatpush1.msra.mxu0 %v418
    %546 = vmatprep.subr.mxu0 0.0
    %547 = vmatpush1.msra.mxu0 %v417
    %548 = vmatprep.subr.mxu0 0.0
    %549 = vmatpush1.msra.mxu0 %v416
    %550 = vmatprep.subr.mxu0 0.0
    %551 = vmatpush1.msra.mxu0 %v415
    %552 = vmatprep.subr.mxu0 0.0
    %553 = vmatpush1.msra.mxu0 %v414
    %554 = vmatprep.subr.mxu0 0.0
    %555 = vmatpush1.msra.mxu0 %v413
    %556 = vmatprep.subr.mxu0 0.0
    %557 = vmatpush1.msra.mxu0 %v412
    %558 = vmatprep.subr.mxu0 0.0
    %559 = vmatpush2.msra.mxu0 %v443
    %560 = vmatprep.subr.mxu0 0.0
    %561 = vmatpush2.msra.mxu0 %v442
    %562 = vmatprep.subr.mxu0 0.0
    %563 = vmatpush2.msra.mxu0 %v441
    %564 = vmatprep.subr.mxu0 0.0
    %565 = vmatpush2.msra.mxu0 %v440
    %566 = vmatprep.subr.mxu0 0.0
    %567 = vmatpush2.msra.mxu0 %v439
    %568 = vmatprep.subr.mxu0 0.0
    %569 = vmatpush2.msra.mxu0 %v438
    %570 = vmatprep.subr.mxu0 0.0
    %571 = vmatpush2.msra.mxu0 %v437
    %572 = vmatprep.subr.mxu0 0.0
    %573 = vmatpush2.msra.mxu0 %v436
    %574 = vmatprep.subr.mxu0 0.0
    %575 = vmatpush2.msra.mxu0 %v435
    %576 = vmatprep.subr.mxu0 0.0
    %577 = vmatpush2.msra.mxu0 %v434
    %578 = vmatprep.subr.mxu0 0.0
    %579 = vmatpush2.msra.mxu0 %v433
    %580 = vmatprep.subr.mxu0 0.0
    %581 = vmatpush2.msra.mxu0 %v432
    %582 = vmatprep.subr.mxu0 0.0
    %583 = vmatpush2.msra.mxu0 %v431
    %584 = vmatprep.subr.mxu0 0.0
    %585 = vmatpush2.msra.mxu0 %v430
    %586 = vmatprep.subr.mxu0 0.0
    %587 = vmatpush2.msra.mxu0 %v429
    %588 = vmatprep.subr.mxu0 0.0
    %589 = vmatpush2.msra.mxu0 %v428
    %590 = vmatprep.mubr.f32.mxu0 %v375
    %591 = vmatmul.mubr.f32.gmra.mxu0 %v374
    %v592 = vpop.f32.mrf.mxu0
    %v593 = vadd.f32 %v518, %v592
    %v594 = vpop.f32.mrf.mxu0
    %595 = vmatprep.mubr.f32.mxu0 %v379
    %596 = vmatmul.mubr.f32.gmra.mxu0 %v378
    %v597 = vpop.f32.mrf.mxu0
    %v598 = vadd.f32 %v523, %v597
    %v599 = vpop.f32.mrf.mxu0
    %600 = vdwg.mxu0
    %601 = vst [vmem:[#allocation10] sm:$0xff] %v593
    %602 = vst [vmem:[#allocation10 + $0x8] sm:$0xff] %v598
    // Predicated region
    $region38: #{tpu_custom_call.1} parent=1 // pred_check
      _
    $region39: #{tpu_custom_call.1} parent=1 // pred_check_branch
      %604 = sbr.rel (0) target = $region41
    $region40: #{tpu_custom_call.1} parent=1 // pred_region
      %s606 = ssub.s32 256, 256
      %607 = vsyncadd [#allocation4], %s606
      %s608 = sshll.u32 [#allocation10], 4
      %s609 = int_to_ptr.vmem [resolvable:$true] %s608
      %614 = dma.vmem_to_hbm [thread:$0]  %s609, 256, %s5, [#allocation4], 128, 128, 8
    $region41: #{tpu_custom_call.1} parent=1 // pred_fallthru
      _
    // Predicated region
    $region42: #{tpu_custom_call.1} parent=1 // pred_check
      _
    $region43: #{tpu_custom_call.1} parent=1 // pred_check_branch
      %616 = sbr.rel (0) target = $region45
    $region44: #{tpu_custom_call.1} parent=1 // pred_region
      %617 = dma.done [#allocation4], 256
    $region45: #{tpu_custom_call.1} parent=1 // pred_fallthru
      _
    %618 = vsyncpa [#allocation3], 1
    %619 = vsyncpa [#allocation6], 1
    %620 = vsyncpa [#allocation9], 1
    %621 = vsyncpa [#allocation4], 1

</llo_original>
